<compile_context>
chip_gen: v6e
topology: v6e:2x2x1
jax: 0.10.0
libtpu: 0.0.40
codegen_flags: <defaults>
</compile_context>

<pallas_src>
import functools

import jax
import jax.numpy as jnp
from jax import lax
from jax.experimental import pallas as pl
from jax.experimental.pallas import tpu as pltpu
import numpy as np


def _rup(v, m):
    return -(-v // m) * m


def _vmem_capacity_bytes():
    """Per-core VMEM capacity; conservative fallback (v7x = 64 MiB)."""
    try:
        info = pltpu.get_tpu_info()
        cap = int(getattr(info, "vmem_capacity_bytes", 0) or 0)
        if cap > 0:
            return cap
    except Exception:
        pass
    return 64 << 20


def _invariant_spec(a, single_buffer):
    """Full-array BlockSpec whose block index never changes across the grid.

    Requests single buffering (the default pipeline double-buffers every input
    even when the block index is constant); falls back cleanly on jax versions
    without the pipeline_mode kwarg.
    """
    nd = a.ndim
    imap = lambda i, _nd=nd: (0,) * _nd
    if single_buffer:
        try:
            return pl.BlockSpec(a.shape, imap, pipeline_mode=pl.Buffered(1))
        except TypeError:   # older jax: BlockSpec has no pipeline_mode
            pass
    return pl.BlockSpec(a.shape, imap)


def _icarnn_kernel(
    x_ref,       # (tc, B_pad, C)  time-major input chunk (raw, ICA folded into a_*)
    h0_ref,      # (2, B_pad, H)   initial hidden (fwd, bwd)
    af_ref,      # (C, H)  fused fwd input->hidden (V, W, wih_f folded)
    cf_ref,      # (1, H)  fused fwd bias (V_b, W, wih_f, bih_f, bhh_f folded)
    whhf_ref,    # (H, H)  rnn.weight_hh_l0^T
    ab_ref,      # (C, H)  fused bwd input->hidden
    cb_ref,      # (1, H)  fused bwd bias
    whhb_ref,    # (H, H)  rnn.weight_hh_l0_reverse^T
    fcwf_ref,    # (H, O)  fc.weight[:, :H]^T
    fcwb_ref,    # (H, O)  fc.weight[:, H:]^T
    fcb_ref,     # (1, O)  fc.bias
    out_ref,     # (B_pad, O)
    h_scratch,   # (B_pad, H)      VMEM carry for the forward hidden state
    pre_scratch, # (tc, B_pad, H)  hoisted h-independent projection, sublane aligned
    *, unroll,
):
    tc, B_pad, C = x_ref.shape
    H = h_scratch.shape[1]
    chunk = pl.program_id(0)

    @pl.when(chunk == 0)
    def _init():
        h_scratch[...] = h0_ref[0]

    # ONE batched matmul for every h-independent term of this chunk:
    # (tc*B_pad, C) @ (C, H) + bias.  B_pad % 8 == 0, so the reshape merges
    # tile-aligned sublane groups (layout no-op) and every pre_scratch[t]
    # slice starts on a sublane boundary.
    xc = x_ref[...].reshape(tc * B_pad, C)
    pre = (jnp.dot(xc, af_ref[...], preferred_element_type=jnp.float32)
           + cf_ref[...])                                   # (tc*B_pad, H)
    pre_scratch[...] = pre.reshape(tc, B_pad, H)

    whhf = whhf_ref[...]

    # Serial recurrence: per step only (B_pad,H)@(H,H) + add + tanh.
    def step(t, h):
        return jnp.tanh(pre_scratch[t]
                        + jnp.dot(h, whhf, preferred_element_type=jnp.float32))

    h = lax.fori_loop(0, tc, step, h_scratch[...], unroll=unroll)
    h_scratch[...] = h

    @pl.when(chunk == pl.num_programs(0) - 1)
    def _finalize():
        # Backward direction: out[-1] only consumes the FIRST step of the
        # reversed scan (it processes t = T-1), seeded from h0[1].
        h_b = jnp.tanh(
            jnp.dot(x_ref[tc - 1], ab_ref[...],
                    preferred_element_type=jnp.float32)
            + cb_ref[...]
            + jnp.dot(h0_ref[1], whhb_ref[...],
                      preferred_element_type=jnp.float32))
        # fc on concat(h_f, h_b) expressed as a split matmul (no concat).
        out = (jnp.dot(h, fcwf_ref[...], preferred_element_type=jnp.float32)
               + jnp.dot(h_b, fcwb_ref[...], preferred_element_type=jnp.float32)
               + fcb_ref[...])
        out_ref[...] = out.astype(out_ref.dtype)


@functools.partial(jax.jit, static_argnames=("tc", "single_buffer"))
def icarnn_forward(x_bct, h0, params, *, tc=None, single_buffer=True):
    """x_bct: (B, C, T); h0: (2, B, H). Returns (B, O)."""
    B, C, T = x_bct.shape
    H = params["whh_f"].shape[0]
    O = params["fc_w"].shape[0]
    B_pad = _rup(B, 8)
    f32 = jnp.float32
    lane = lambda n: _rup(n, 128)

    # --- Generation-aware VMEM budget (v7x: 64 MiB/TC, v5e/v6e: 128 MiB). ---
    budget = int(0.75 * _vmem_capacity_bytes())
    # Grid-invariant residents (conservatively count two buffers each in case
    # single-buffering is unavailable) + hidden carry + output.
    fixed = 4 * (2 * (2 * B_pad * lane(H)                       # h0
                      + 2 * (_rup(C, 8) * lane(H)               # a_f / a_b
                             + _rup(H, 8) * lane(H)             # whh_f / whh_b
                             + _rup(H, 8) * lane(O)             # fc halves
                             + 8 * lane(H))                     # c_f / c_b
                      + 8 * lane(O)                             # fc bias
                      + B_pad * lane(O))                        # out
                 + B_pad * lane(H))                             # h carry
    per_t = 4 * B_pad * (2 * lane(C) + lane(H))   # x chunk (x2 bufs) + pre scratch
    max_tc = max(int((budget - fixed - (4 << 20)) // per_t), 1)

    if tc is None:
        # Fewest, largest chunks that fit: each grid step costs ~0.35 us of
        # pipeline overhead and one h_scratch round trip.
        tc = max(d for d in range(1, T + 1) if T % d == 0 and d <= max_tc)
    assert T % tc == 0, (T, tc)
    n_chunks = T // tc
    # Unroll factor that divides tc (keeps the fori_loop remainder-free).
    unroll = max(u for u in (8, 4, 2, 1) if tc % u == 0)

    # Time-major + batch padded to a sublane multiple.  The pad forces one
    # wrapper-side copy anyway, so it subsumes the transpose copy.
    x_t = jnp.transpose(x_bct, (2, 0, 1)).astype(f32)            # (T, B, C)
    x_t = jnp.pad(x_t, ((0, 0), (0, B_pad - B), (0, 0)))         # (T, B_pad, C)
    h0p = jnp.pad(h0.astype(f32), ((0, 0), (0, B_pad - B), (0, 0)))

    # Fold frozen ICA layers and RNN biases once, outside the recurrence:
    #   ((x @ Vw^T + Vb) @ Ww^T) @ wih^T + bih + bhh
    #   = x @ (Vw^T Ww^T wih^T) + (Vb Ww^T wih^T + bih + bhh)
    mix = params["V_w"].T @ params["W_w"].T                      # (C, C)
    mix_b = params["V_b"] @ params["W_w"].T                      # (C,)
    a_f = (mix @ params["wih_f"].T).astype(f32)                  # (C, H)
    c_f = (mix_b @ params["wih_f"].T + params["bih_f"]
           + params["bhh_f"]).reshape(1, H).astype(f32)
    a_b = (mix @ params["wih_b"].T).astype(f32)                  # (C, H)
    c_b = (mix_b @ params["wih_b"].T + params["bih_b"]
           + params["bhh_b"]).reshape(1, H).astype(f32)

    args = (
        x_t, h0p,
        a_f, c_f, params["whh_f"].T.astype(f32),
        a_b, c_b, params["whh_b"].T.astype(f32),
        params["fc_w"][:, :H].T.astype(f32),
        params["fc_w"][:, H:].T.astype(f32),
        params["fc_b"].reshape(1, O).astype(f32),
    )

    in_specs = ([pl.BlockSpec((tc, B_pad, C), lambda i: (i, 0, 0))]
                + [_invariant_spec(a, single_buffer) for a in args[1:]])
    out_specs = pl.BlockSpec((B_pad, O), lambda i: (0, 0))

    # Advisory cost for the XLA scheduler.
    flops = (2 * T * B_pad * C * H            # batched input->hidden projection
             + 2 * T * B_pad * H * H          # forward recurrence
             + 2 * B_pad * C * H + 2 * B_pad * H * H   # single backward step
             + 2 * 2 * B_pad * H * O)         # fc head
    bytes_accessed = 4 * (T * B_pad * C + 2 * B_pad * H
                          + 2 * (C * H + H * H + H * O + H) + O + B_pad * O)
    cost = pl.CostEstimate(flops=flops,
                           transcendentals=(T + 1) * B_pad * H,
                           bytes_accessed=bytes_accessed)

    vmem_limit = int(min(max(fixed + per_t * tc + (4 << 20), 16 << 20), budget))

    out_pad = pl.pallas_call(
        functools.partial(_icarnn_kernel, unroll=unroll),
        out_shape=jax.ShapeDtypeStruct((B_pad, O), f32),
        grid_spec=pltpu.PrefetchScalarGridSpec(
            num_scalar_prefetch=0,
            grid=(n_chunks,),
            in_specs=in_specs,
            out_specs=out_specs,
            scratch_shapes=[pltpu.VMEM((B_pad, H), f32),       # h carry
                            pltpu.VMEM((tc, B_pad, H), f32)],  # hoisted pre
        ),
        compiler_params=pltpu.CompilerParams(
            dimension_semantics=("arbitrary",),   # time carry => serial axis
            vmem_limit_bytes=vmem_limit,
        ),
        cost_estimate=cost,
    )(*args)
    return out_pad[:B]


def ref_forward(x_bct, h0, params):
    """Pure-JAX reference mirroring the PyTorch module literally
    (full bidirectional RNN, then out[-1], then fc)."""
    x = jnp.transpose(x_bct, (2, 0, 1))                   # (T, B, C)
    x = x @ params["V_w"].T + params["V_b"]
    x = x @ params["W_w"].T

    def step(wih, whh, bih, bhh):
        def f(h, xt):
            h = jnp.tanh(xt @ wih.T + bih + h @ whh.T + bhh)
            return h, h
        return f

    _, hs_f = lax.scan(step(params["wih_f"], params["whh_f"],
                            params["bih_f"], params["bhh_f"]), h0[0], x)
    _, hs_b_rev = lax.scan(step(params["wih_b"], params["whh_b"],
                                params["bih_b"], params["bhh_b"]), h0[1], x[::-1])
    hs_b = hs_b_rev[::-1]
    out_last = jnp.concatenate([hs_f[-1], hs_b[-1]], axis=-1)   # (B, 2H)
    return out_last @ params["fc_w"].T + params["fc_b"]


def make_params(key, C, H, O):
    ks = jax.random.split(key, 14)
    u = lambda k, shape, s: jax.random.uniform(k, shape, jnp.float32, -s, s)
    sC, sH, sO = 1.0 / np.sqrt(C), 1.0 / np.sqrt(H), 1.0 / np.sqrt(2 * H)
    return {
        # Frozen ICA layers (V_weight, W_weight, V_bias in the ctor).
        "V_w": u(ks[0], (C, C), sC), "V_b": u(ks[1], (C,), sC),
        "W_w": u(ks[2], (C, C), sC),
        # RNN forward direction.
        "wih_f": u(ks[3], (H, C), sH), "whh_f": u(ks[4], (H, H), sH),
        "bih_f": u(ks[5], (H,), sH), "bhh_f": u(ks[6], (H,), sH),
        # RNN backward direction.
        "wih_b": u(ks[7], (H, C), sH), "whh_b": u(ks[8], (H, H), sH),
        "bih_b": u(ks[9], (H,), sH), "bhh_b": u(ks[10], (H,), sH),
        # Output head.
        "fc_w": u(ks[11], (O, 2 * H), sO), "fc_b": u(ks[12], (O,), sO),
    }


if __name__ == "__main__":
    B, C, T, H, O = 2, 4, 16, 32, 4

    key = jax.random.PRNGKey(0)
    kp, kx = jax.random.split(key)
    params = make_params(kp, C, H, O)

    x = jax.random.normal(kx, (B, C, T), jnp.float32)     # module input (N, C, T)
    h0 = jnp.zeros((2, B, H), jnp.float32)                # initHidden equivalent

    ref = ref_forward(x, h0, params)

    # 1) Forced multi-chunk grid path (tc=4 -> 4 grid steps, exercises the
    #    VMEM-carried hidden state).  If this jax build rejects the
    #    single-buffered (Buffered(1)) weight specs, retry double-buffered.
    single_buffer = True
    try:
        out_chunked = jax.block_until_ready(
            icarnn_forward(x, h0, params, tc=4, single_buffer=True))
    except Exception:
        single_buffer = False
        out_chunked = jax.block_until_ready(
            icarnn_forward(x, h0, params, tc=4, single_buffer=False))
    np.testing.assert_allclose(np.asarray(out_chunked), np.asarray(ref),
                               rtol=1e-3, atol=1e-3)

    # 2) Auto-picked chunking (single chunk at this small T).
    out = jax.block_until_ready(
        icarnn_forward(x, h0, params, single_buffer=single_buffer))
    np.testing.assert_allclose(np.asarray(out), np.asarray(ref),
                               rtol=1e-3, atol=1e-3)

    assert out.shape == (B, O)
    print("KERNEL_OK")
</pallas_src>

<mosaic_0001>
module attributes {stable_mosaic.version = 11 : i64} {
  func.func @_icarnn_kernel(%arg0: i32, %arg1: memref<4x8x4xf32, #tpu.memory_space<vmem>>, %arg2: memref<2x8x32xf32, #tpu.memory_space<vmem>>, %arg3: memref<4x32xf32, #tpu.memory_space<vmem>>, %arg4: memref<1x32xf32, #tpu.memory_space<vmem>>, %arg5: memref<32x32xf32, #tpu.memory_space<vmem>>, %arg6: memref<4x32xf32, #tpu.memory_space<vmem>>, %arg7: memref<1x32xf32, #tpu.memory_space<vmem>>, %arg8: memref<32x32xf32, #tpu.memory_space<vmem>>, %arg9: memref<32x4xf32, #tpu.memory_space<vmem>>, %arg10: memref<32x4xf32, #tpu.memory_space<vmem>>, %arg11: memref<1x4xf32, #tpu.memory_space<vmem>>, %arg12: memref<8x4xf32, #tpu.memory_space<vmem>>, %arg13: memref<8x32xf32, #tpu.memory_space<vmem>>, %arg14: memref<4x8x32xf32, #tpu.memory_space<vmem>>) attributes {dimension_semantics = [#tpu.dimension_semantics<arbitrary>], iteration_bounds = array<i64: 4>, scalar_prefetch = 0 : i64, scratch_operands = 2 : i64, tpu.core_type = #tpu.core_type<tc>, window_params = [{transform_indices = @transform_0, window_bounds = array<i64: 4, 8, 4>}, {pipeline_mode = #tpu.pipeline_mode<synchronous>, transform_indices = @transform_1, window_bounds = array<i64: 2, 8, 32>}, {pipeline_mode = #tpu.pipeline_mode<synchronous>, transform_indices = @transform_2, window_bounds = array<i64: 4, 32>}, {pipeline_mode = #tpu.pipeline_mode<synchronous>, transform_indices = @transform_3, window_bounds = array<i64: 1, 32>}, {pipeline_mode = #tpu.pipeline_mode<synchronous>, transform_indices = @transform_4, window_bounds = array<i64: 32, 32>}, {pipeline_mode = #tpu.pipeline_mode<synchronous>, transform_indices = @transform_5, window_bounds = array<i64: 4, 32>}, {pipeline_mode = #tpu.pipeline_mode<synchronous>, transform_indices = @transform_6, window_bounds = array<i64: 1, 32>}, {pipeline_mode = #tpu.pipeline_mode<synchronous>, transform_indices = @transform_7, window_bounds = array<i64: 32, 32>}, {pipeline_mode = #tpu.pipeline_mode<synchronous>, transform_indices = @transform_8, window_bounds = array<i64: 32, 4>}, {pipeline_mode = #tpu.pipeline_mode<synchronous>, transform_indices = @transform_9, window_bounds = array<i64: 32, 4>}, {pipeline_mode = #tpu.pipeline_mode<synchronous>, transform_indices = @transform_10, window_bounds = array<i64: 1, 4>}, {pipeline_mode = #tpu.pipeline_mode<synchronous>, transform_indices = @transform_11, window_bounds = array<i64: 8, 4>}]} {
    %c0_i32 = arith.constant 0 : i32
    %0 = arith.cmpi eq, %arg0, %c0_i32 : i32
    %1 = arith.extui %0 : i1 to i32
    %c0_i32_0 = arith.constant 0 : i32
    %2 = arith.cmpi ne, %1, %c0_i32_0 : i32
    scf.if %2 {
      %c0_31 = arith.constant 0 : index
      %c0_32 = arith.constant 0 : index
      %c0_33 = arith.constant 0 : index
      %42 = vector.load %arg2[%c0_31, %c0_32, %c0_33] : memref<2x8x32xf32, #tpu.memory_space<vmem>>, vector<1x8x32xf32>
      %43 = vector.shape_cast %42 : vector<1x8x32xf32> to vector<8x32xf32>
      %c0_34 = arith.constant 0 : index
      %c0_35 = arith.constant 0 : index
      %44 = vector.load %arg13[%c0_34, %c0_35] : memref<8x32xf32, #tpu.memory_space<vmem>>, vector<8x32xf32>
      tpu.vector_store %arg13[%c0_34, %c0_35], %43 {strides = array<i32>} : memref<8x32xf32, #tpu.memory_space<vmem>>, vector<8x32xf32>,
    } else {
    }
    %c0 = arith.constant 0 : index
    %c0_1 = arith.constant 0 : index
    %c0_2 = arith.constant 0 : index
    %3 = vector.load %arg1[%c0, %c0_1, %c0_2] : memref<4x8x4xf32, #tpu.memory_space<vmem>>, vector<4x8x4xf32>
    %4 = vector.shape_cast %3 : vector<4x8x4xf32> to vector<32x4xf32>
    %c0_3 = arith.constant 0 : index
    %c0_4 = arith.constant 0 : index
    %5 = vector.load %arg3[%c0_3, %c0_4] : memref<4x32xf32, #tpu.memory_space<vmem>>, vector<4x32xf32>
    %cst = arith.constant dense<0.000000e+00> : vector<32x32xf32>
    %6 = tpu.matmul %4, %5, %cst {dimension_numbers = #tpu.dot_dimension_numbers<[1], [0], [0], [1], [0, 0, 1, 1], [], []>} : vector<32x4xf32>, vector<4x32xf32>, vector<32x32xf32> -> vector<32x32xf32>
    %c0_5 = arith.constant 0 : index
    %c0_6 = arith.constant 0 : index
    %7 = vector.load %arg4[%c0_5, %c0_6] : memref<1x32xf32, #tpu.memory_space<vmem>>, vector<1x32xf32>
    %8 = vector.broadcast %7 : vector<1x32xf32> to vector<32x32xf32>
    %9 = arith.addf %6, %8 : vector<32x32xf32>
    %10 = vector.shape_cast %9 : vector<32x32xf32> to vector<4x8x32xf32>
    %c0_7 = arith.constant 0 : index
    %c0_8 = arith.constant 0 : index
    %c0_9 = arith.constant 0 : index
    %11 = vector.load %arg14[%c0_7, %c0_8, %c0_9] : memref<4x8x32xf32, #tpu.memory_space<vmem>>, vector<4x8x32xf32>
    tpu.vector_store %arg14[%c0_7, %c0_8, %c0_9], %10 {strides = array<i32>} : memref<4x8x32xf32, #tpu.memory_space<vmem>>, vector<4x8x32xf32>,
    %c0_10 = arith.constant 0 : index
    %c0_11 = arith.constant 0 : index
    %12 = vector.load %arg5[%c0_10, %c0_11] : memref<32x32xf32, #tpu.memory_space<vmem>>, vector<32x32xf32>
    %c0_12 = arith.constant 0 : index
    %c0_13 = arith.constant 0 : index
    %13 = vector.load %arg13[%c0_12, %c0_13] : memref<8x32xf32, #tpu.memory_space<vmem>>, vector<8x32xf32>
    %c0_i32_14 = arith.constant 0 : i32
    %14 = arith.index_cast %c0_i32_14 : i32 to index
    %c0_15 = arith.constant 0 : index
    %c0_16 = arith.constant 0 : index
    %15 = vector.load %arg14[%14, %c0_15, %c0_16] : memref<4x8x32xf32, #tpu.memory_space<vmem>>, vector<1x8x32xf32>
    %16 = vector.shape_cast %15 : vector<1x8x32xf32> to vector<8x32xf32>
    %cst_17 = arith.constant dense<0.000000e+00> : vector<8x32xf32>
    %17 = tpu.matmul %13, %12, %cst_17 {dimension_numbers = #tpu.dot_dimension_numbers<[1], [0], [0], [1], [0, 0, 1, 1], [], []>} : vector<8x32xf32>, vector<32x32xf32>, vector<8x32xf32> -> vector<8x32xf32>
    %18 = arith.addf %16, %17 : vector<8x32xf32>
    %19 = math.tanh %18 : vector<8x32xf32>
    %c1_i32 = arith.constant 1 : i32
    %20 = arith.index_cast %c1_i32 : i32 to index
    %c0_18 = arith.constant 0 : index
    %c0_19 = arith.constant 0 : index
    %21 = vector.load %arg14[%20, %c0_18, %c0_19] : memref<4x8x32xf32, #tpu.memory_space<vmem>>, vector<1x8x32xf32>
    %22 = vector.shape_cast %21 : vector<1x8x32xf32> to vector<8x32xf32>
    %cst_20 = arith.constant dense<0.000000e+00> : vector<8x32xf32>
    %23 = tpu.matmul %19, %12, %cst_20 {dimension_numbers = #tpu.dot_dimension_numbers<[1], [0], [0], [1], [0, 0, 1, 1], [], []>} : vector<8x32xf32>, vector<32x32xf32>, vector<8x32xf32> -> vector<8x32xf32>
    %24 = arith.addf %22, %23 : vector<8x32xf32>
    %25 = math.tanh %24 : vector<8x32xf32>
    %c2_i32 = arith.constant 2 : i32
    %26 = arith.index_cast %c2_i32 : i32 to index
    %c0_21 = arith.constant 0 : index
    %c0_22 = arith.constant 0 : index
    %27 = vector.load %arg14[%26, %c0_21, %c0_22] : memref<4x8x32xf32, #tpu.memory_space<vmem>>, vector<1x8x32xf32>
    %28 = vector.shape_cast %27 : vector<1x8x32xf32> to vector<8x32xf32>
    %cst_23 = arith.constant dense<0.000000e+00> : vector<8x32xf32>
    %29 = tpu.matmul %25, %12, %cst_23 {dimension_numbers = #tpu.dot_dimension_numbers<[1], [0], [0], [1], [0, 0, 1, 1], [], []>} : vector<8x32xf32>, vector<32x32xf32>, vector<8x32xf32> -> vector<8x32xf32>
    %30 = arith.addf %28, %29 : vector<8x32xf32>
    %31 = math.tanh %30 : vector<8x32xf32>
    %c3_i32 = arith.constant 3 : i32
    %32 = arith.index_cast %c3_i32 : i32 to index
    %c0_24 = arith.constant 0 : index
    %c0_25 = arith.constant 0 : index
    %33 = vector.load %arg14[%32, %c0_24, %c0_25] : memref<4x8x32xf32, #tpu.memory_space<vmem>>, vector<1x8x32xf32>
    %34 = vector.shape_cast %33 : vector<1x8x32xf32> to vector<8x32xf32>
    %cst_26 = arith.constant dense<0.000000e+00> : vector<8x32xf32>
    %35 = tpu.matmul %31, %12, %cst_26 {dimension_numbers = #tpu.dot_dimension_numbers<[1], [0], [0], [1], [0, 0, 1, 1], [], []>} : vector<8x32xf32>, vector<32x32xf32>, vector<8x32xf32> -> vector<8x32xf32>
    %36 = arith.addf %34, %35 : vector<8x32xf32>
    %37 = math.tanh %36 : vector<8x32xf32>
    %c4_i32 = arith.constant 4 : i32
    %c0_27 = arith.constant 0 : index
    %c0_28 = arith.constant 0 : index
    %38 = vector.load %arg13[%c0_27, %c0_28] : memref<8x32xf32, #tpu.memory_space<vmem>>, vector<8x32xf32>
    tpu.vector_store %arg13[%c0_27, %c0_28], %37 {strides = array<i32>} : memref<8x32xf32, #tpu.memory_space<vmem>>, vector<8x32xf32>,
    %c3_i32_29 = arith.constant 3 : i32
    %39 = arith.cmpi eq, %arg0, %c3_i32_29 : i32
    %40 = arith.extui %39 : i1 to i32
    %c0_i32_30 = arith.constant 0 : i32
    %41 = arith.cmpi ne, %40, %c0_i32_30 : i32
    scf.if %41 {
      %c3 = arith.constant 3 : index
      %c0_31 = arith.constant 0 : index
      %c0_32 = arith.constant 0 : index
      %42 = vector.load %arg1[%c3, %c0_31, %c0_32] : memref<4x8x4xf32, #tpu.memory_space<vmem>>, vector<1x8x4xf32>
      %43 = vector.shape_cast %42 : vector<1x8x4xf32> to vector<8x4xf32>
      %c0_33 = arith.constant 0 : index
      %c0_34 = arith.constant 0 : index
      %44 = vector.load %arg6[%c0_33, %c0_34] : memref<4x32xf32, #tpu.memory_space<vmem>>, vector<4x32xf32>
      %cst_35 = arith.constant dense<0.000000e+00> : vector<8x32xf32>
      %45 = tpu.matmul %43, %44, %cst_35 {dimension_numbers = #tpu.dot_dimension_numbers<[1], [0], [0], [1], [0, 0, 1, 1], [], []>} : vector<8x4xf32>, vector<4x32xf32>, vector<8x32xf32> -> vector<8x32xf32>
      %c0_36 = arith.constant 0 : index
      %c0_37 = arith.constant 0 : index
      %46 = vector.load %arg7[%c0_36, %c0_37] : memref<1x32xf32, #tpu.memory_space<vmem>>, vector<1x32xf32>
      %47 = vector.broadcast %46 : vector<1x32xf32> to vector<8x32xf32>
      %48 = arith.addf %45, %47 : vector<8x32xf32>
      %c1 = arith.constant 1 : index
      %c0_38 = arith.constant 0 : index
      %c0_39 = arith.constant 0 : index
      %49 = vector.load %arg2[%c1, %c0_38, %c0_39] : memref<2x8x32xf32, #tpu.memory_space<vmem>>, vector<1x8x32xf32>
      %50 = vector.shape_cast %49 : vector<1x8x32xf32> to vector<8x32xf32>
      %c0_40 = arith.constant 0 : index
      %c0_41 = arith.constant 0 : index
      %51 = vector.load %arg8[%c0_40, %c0_41] : memref<32x32xf32, #tpu.memory_space<vmem>>, vector<32x32xf32>
      %cst_42 = arith.constant dense<0.000000e+00> : vector<8x32xf32>
      %52 = tpu.matmul %50, %51, %cst_42 {dimension_numbers = #tpu.dot_dimension_numbers<[1], [0], [0], [1], [0, 0, 1, 1], [], []>} : vector<8x32xf32>, vector<32x32xf32>, vector<8x32xf32> -> vector<8x32xf32>
      %53 = arith.addf %48, %52 : vector<8x32xf32>
      %54 = math.tanh %53 : vector<8x32xf32>
      %c0_43 = arith.constant 0 : index
      %c0_44 = arith.constant 0 : index
      %55 = vector.load %arg9[%c0_43, %c0_44] : memref<32x4xf32, #tpu.memory_space<vmem>>, vector<32x4xf32>
      %cst_45 = arith.constant dense<0.000000e+00> : vector<8x4xf32>
      %56 = tpu.matmul %37, %55, %cst_45 {dimension_numbers = #tpu.dot_dimension_numbers<[1], [0], [0], [1], [0, 0, 1, 1], [], []>} : vector<8x32xf32>, vector<32x4xf32>, vector<8x4xf32> -> vector<8x4xf32>
      %c0_46 = arith.constant 0 : index
      %c0_47 = arith.constant 0 : index
      %57 = vector.load %arg10[%c0_46, %c0_47] : memref<32x4xf32, #tpu.memory_space<vmem>>, vector<32x4xf32>
      %cst_48 = arith.constant dense<0.000000e+00> : vector<8x4xf32>
      %58 = tpu.matmul %54, %57, %cst_48 {dimension_numbers = #tpu.dot_dimension_numbers<[1], [0], [0], [1], [0, 0, 1, 1], [], []>} : vector<8x32xf32>, vector<32x4xf32>, vector<8x4xf32> -> vector<8x4xf32>
      %59 = arith.addf %56, %58 : vector<8x4xf32>
      %c0_49 = arith.constant 0 : index
      %c0_50 = arith.constant 0 : index
      %60 = vector.load %arg11[%c0_49, %c0_50] : memref<1x4xf32, #tpu.memory_space<vmem>>, vector<1x4xf32>
      %61 = vector.broadcast %60 : vector<1x4xf32> to vector<8x4xf32>
      %62 = arith.addf %59, %61 : vector<8x4xf32>
      %c0_51 = arith.constant 0 : index
      %c0_52 = arith.constant 0 : index
      %63 = vector.load %arg12[%c0_51, %c0_52] : memref<8x4xf32, #tpu.memory_space<vmem>>, vector<8x4xf32>
      tpu.vector_store %arg12[%c0_51, %c0_52], %62 {strides = array<i32>} : memref<8x4xf32, #tpu.memory_space<vmem>>, vector<8x4xf32>,
    } else {
    }
    return
  }
  func.func @transform_0(%arg0: i32) -> (i32, i32, i32) {
    %c0_i32 = arith.constant 0 : i32
    %c0_i32_0 = arith.constant 0 : i32
    %c0_i32_1 = arith.constant 0 : i32
    return %arg0, %c0_i32, %c0_i32_0 : i32, i32, i32
  }
  func.func @transform_1(%arg0: i32) -> (i32, i32, i32) {
    %c0_i32 = arith.constant 0 : i32
    %c0_i32_0 = arith.constant 0 : i32
    %c0_i32_1 = arith.constant 0 : i32
    %c0_i32_2 = arith.constant 0 : i32
    return %c0_i32, %c0_i32_0, %c0_i32_1 : i32, i32, i32
  }
  func.func @transform_2(%arg0: i32) -> (i32, i32) {
    %c0_i32 = arith.constant 0 : i32
    %c0_i32_0 = arith.constant 0 : i32
    %c0_i32_1 = arith.constant 0 : i32
    return %c0_i32, %c0_i32_0 : i32, i32
  }
  func.func @transform_3(%arg0: i32) -> (i32, i32) {
    %c0_i32 = arith.constant 0 : i32
    %c0_i32_0 = arith.constant 0 : i32
    %c0_i32_1 = arith.constant 0 : i32
    return %c0_i32, %c0_i32_0 : i32, i32
  }
  func.func @transform_4(%arg0: i32) -> (i32, i32) {
    %c0_i32 = arith.constant 0 : i32
    %c0_i32_0 = arith.constant 0 : i32
    %c0_i32_1 = arith.constant 0 : i32
    return %c0_i32, %c0_i32_0 : i32, i32
  }
  func.func @transform_5(%arg0: i32) -> (i32, i32) {
    %c0_i32 = arith.constant 0 : i32
    %c0_i32_0 = arith.constant 0 : i32
    %c0_i32_1 = arith.constant 0 : i32
    return %c0_i32, %c0_i32_0 : i32, i32
  }
  func.func @transform_6(%arg0: i32) -> (i32, i32) {
    %c0_i32 = arith.constant 0 : i32
    %c0_i32_0 = arith.constant 0 : i32
    %c0_i32_1 = arith.constant 0 : i32
    return %c0_i32, %c0_i32_0 : i32, i32
  }
  func.func @transform_7(%arg0: i32) -> (i32, i32) {
    %c0_i32 = arith.constant 0 : i32
    %c0_i32_0 = arith.constant 0 : i32
    %c0_i32_1 = arith.constant 0 : i32
    return %c0_i32, %c0_i32_0 : i32, i32
  }
  func.func @transform_8(%arg0: i32) -> (i32, i32) {
    %c0_i32 = arith.constant 0 : i32
    %c0_i32_0 = arith.constant 0 : i32
    %c0_i32_1 = arith.constant 0 : i32
    return %c0_i32, %c0_i32_0 : i32, i32
  }
  func.func @transform_9(%arg0: i32) -> (i32, i32) {
    %c0_i32 = arith.constant 0 : i32
    %c0_i32_0 = arith.constant 0 : i32
    %c0_i32_1 = arith.constant 0 : i32
    return %c0_i32, %c0_i32_0 : i32, i32
  }
  func.func @transform_10(%arg0: i32) -> (i32, i32) {
    %c0_i32 = arith.constant 0 : i32
    %c0_i32_0 = arith.constant 0 : i32
    %c0_i32_1 = arith.constant 0 : i32
    return %c0_i32, %c0_i32_0 : i32, i32
  }
  func.func @transform_11(%arg0: i32) -> (i32, i32) {
    %c0_i32 = arith.constant 0 : i32
    %c0_i32_0 = arith.constant 0 : i32
    %c0_i32_1 = arith.constant 0 : i32
    return %c0_i32, %c0_i32_0 : i32, i32
  }
}

module attributes {stable_mosaic.version = 11 : i64} {
  func.func @_icarnn_kernel(%arg0: i32, %arg1: memref<4x8x4xf32, #tpu.memory_space<vmem>>, %arg2: memref<2x8x32xf32, #tpu.memory_space<vmem>>, %arg3: memref<4x32xf32, #tpu.memory_space<vmem>>, %arg4: memref<1x32xf32, #tpu.memory_space<vmem>>, %arg5: memref<32x32xf32, #tpu.memory_space<vmem>>, %arg6: memref<4x32xf32, #tpu.memory_space<vmem>>, %arg7: memref<1x32xf32, #tpu.memory_space<vmem>>, %arg8: memref<32x32xf32, #tpu.memory_space<vmem>>, %arg9: memref<32x4xf32, #tpu.memory_space<vmem>>, %arg10: memref<32x4xf32, #tpu.memory_space<vmem>>, %arg11: memref<1x4xf32, #tpu.memory_space<vmem>>, %arg12: memref<8x4xf32, #tpu.memory_space<vmem>>, %arg13: memref<8x32xf32, #tpu.memory_space<vmem>>, %arg14: memref<4x8x32xf32, #tpu.memory_space<vmem>>) attributes {dimension_semantics = [#tpu.dimension_semantics<arbitrary>], iteration_bounds = array<i64: 4>, scalar_prefetch = 0 : i64, scratch_operands = 2 : i64, tpu.core_type = #tpu.core_type<tc>, window_params = [{transform_indices = @transform_0, window_bounds = array<i64: 4, 8, 4>}, {pipeline_mode = #tpu.pipeline_mode<synchronous>, transform_indices = @transform_1, window_bounds = array<i64: 2, 8, 32>}, {pipeline_mode = #tpu.pipeline_mode<synchronous>, transform_indices = @transform_2, window_bounds = array<i64: 4, 32>}, {pipeline_mode = #tpu.pipeline_mode<synchronous>, transform_indices = @transform_3, window_bounds = array<i64: 1, 32>}, {pipeline_mode = #tpu.pipeline_mode<synchronous>, transform_indices = @transform_4, window_bounds = array<i64: 32, 32>}, {pipeline_mode = #tpu.pipeline_mode<synchronous>, transform_indices = @transform_5, window_bounds = array<i64: 4, 32>}, {pipeline_mode = #tpu.pipeline_mode<synchronous>, transform_indices = @transform_6, window_bounds = array<i64: 1, 32>}, {pipeline_mode = #tpu.pipeline_mode<synchronous>, transform_indices = @transform_7, window_bounds = array<i64: 32, 32>}, {pipeline_mode = #tpu.pipeline_mode<synchronous>, transform_indices = @transform_8, window_bounds = array<i64: 32, 4>}, {pipeline_mode = #tpu.pipeline_mode<synchronous>, transform_indices = @transform_9, window_bounds = array<i64: 32, 4>}, {pipeline_mode = #tpu.pipeline_mode<synchronous>, transform_indices = @transform_10, window_bounds = array<i64: 1, 4>}, {pipeline_mode = #tpu.pipeline_mode<synchronous>, transform_indices = @transform_11, window_bounds = array<i64: 8, 4>}]} {
    %c0_i32 = arith.constant 0 : i32
    %0 = arith.cmpi eq, %arg0, %c0_i32 : i32
    %1 = arith.extui %0 : i1 to i32
    %c0_i32_0 = arith.constant 0 : i32
    %2 = arith.cmpi ne, %1, %c0_i32_0 : i32
    scf.if %2 {
      %c0_31 = arith.constant 0 : index
      %c0_32 = arith.constant 0 : index
      %c0_33 = arith.constant 0 : index
      %42 = vector.load %arg2[%c0_31, %c0_32, %c0_33] : memref<2x8x32xf32, #tpu.memory_space<vmem>>, vector<1x8x32xf32>
      %43 = vector.shape_cast %42 : vector<1x8x32xf32> to vector<8x32xf32>
      %c0_34 = arith.constant 0 : index
      %c0_35 = arith.constant 0 : index
      %44 = vector.load %arg13[%c0_34, %c0_35] : memref<8x32xf32, #tpu.memory_space<vmem>>, vector<8x32xf32>
      tpu.vector_store %arg13[%c0_34, %c0_35], %43 {strides = array<i32>} : memref<8x32xf32, #tpu.memory_space<vmem>>, vector<8x32xf32>,
    } else {
    }
    %c0 = arith.constant 0 : index
    %c0_1 = arith.constant 0 : index
    %c0_2 = arith.constant 0 : index
    %3 = vector.load %arg1[%c0, %c0_1, %c0_2] : memref<4x8x4xf32, #tpu.memory_space<vmem>>, vector<4x8x4xf32>
    %4 = vector.shape_cast %3 : vector<4x8x4xf32> to vector<32x4xf32>
    %c0_3 = arith.constant 0 : index
    %c0_4 = arith.constant 0 : index
    %5 = vector.load %arg3[%c0_3, %c0_4] : memref<4x32xf32, #tpu.memory_space<vmem>>, vector<4x32xf32>
    %cst = arith.constant dense<0.000000e+00> : vector<32x32xf32>
    %6 = tpu.matmul %4, %5, %cst {dimension_numbers = #tpu.dot_dimension_numbers<[1], [0], [0], [1], [0, 0, 1, 1], [], []>} : vector<32x4xf32>, vector<4x32xf32>, vector<32x32xf32> -> vector<32x32xf32>
    %c0_5 = arith.constant 0 : index
    %c0_6 = arith.constant 0 : index
    %7 = vector.load %arg4[%c0_5, %c0_6] : memref<1x32xf32, #tpu.memory_space<vmem>>, vector<1x32xf32>
    %8 = vector.broadcast %7 : vector<1x32xf32> to vector<32x32xf32>
    %9 = arith.addf %6, %8 : vector<32x32xf32>
    %10 = vector.shape_cast %9 : vector<32x32xf32> to vector<4x8x32xf32>
    %c0_7 = arith.constant 0 : index
    %c0_8 = arith.constant 0 : index
    %c0_9 = arith.constant 0 : index
    %11 = vector.load %arg14[%c0_7, %c0_8, %c0_9] : memref<4x8x32xf32, #tpu.memory_space<vmem>>, vector<4x8x32xf32>
    tpu.vector_store %arg14[%c0_7, %c0_8, %c0_9], %10 {strides = array<i32>} : memref<4x8x32xf32, #tpu.memory_space<vmem>>, vector<4x8x32xf32>,
    %c0_10 = arith.constant 0 : index
    %c0_11 = arith.constant 0 : index
    %12 = vector.load %arg5[%c0_10, %c0_11] : memref<32x32xf32, #tpu.memory_space<vmem>>, vector<32x32xf32>
    %c0_12 = arith.constant 0 : index
    %c0_13 = arith.constant 0 : index
    %13 = vector.load %arg13[%c0_12, %c0_13] : memref<8x32xf32, #tpu.memory_space<vmem>>, vector<8x32xf32>
    %c0_i32_14 = arith.constant 0 : i32
    %14 = arith.index_cast %c0_i32_14 : i32 to index
    %c0_15 = arith.constant 0 : index
    %c0_16 = arith.constant 0 : index
    %15 = vector.load %arg14[%14, %c0_15, %c0_16] : memref<4x8x32xf32, #tpu.memory_space<vmem>>, vector<1x8x32xf32>
    %16 = vector.shape_cast %15 : vector<1x8x32xf32> to vector<8x32xf32>
    %cst_17 = arith.constant dense<0.000000e+00> : vector<8x32xf32>
    %17 = tpu.matmul %13, %12, %cst_17 {dimension_numbers = #tpu.dot_dimension_numbers<[1], [0], [0], [1], [0, 0, 1, 1], [], []>} : vector<8x32xf32>, vector<32x32xf32>, vector<8x32xf32> -> vector<8x32xf32>
    %18 = arith.addf %16, %17 : vector<8x32xf32>
    %19 = math.tanh %18 : vector<8x32xf32>
    %c1_i32 = arith.constant 1 : i32
    %20 = arith.index_cast %c1_i32 : i32 to index
    %c0_18 = arith.constant 0 : index
    %c0_19 = arith.constant 0 : index
    %21 = vector.load %arg14[%20, %c0_18, %c0_19] : memref<4x8x32xf32, #tpu.memory_space<vmem>>, vector<1x8x32xf32>
    %22 = vector.shape_cast %21 : vector<1x8x32xf32> to vector<8x32xf32>
    %cst_20 = arith.constant dense<0.000000e+00> : vector<8x32xf32>
    %23 = tpu.matmul %19, %12, %cst_20 {dimension_numbers = #tpu.dot_dimension_numbers<[1], [0], [0], [1], [0, 0, 1, 1], [], []>} : vector<8x32xf32>, vector<32x32xf32>, vector<8x32xf32> -> vector<8x32xf32>
    %24 = arith.addf %22, %23 : vector<8x32xf32>
    %25 = math.tanh %24 : vector<8x32xf32>
    %c2_i32 = arith.constant 2 : i32
    %26 = arith.index_cast %c2_i32 : i32 to index
    %c0_21 = arith.constant 0 : index
    %c0_22 = arith.constant 0 : index
    %27 = vector.load %arg14[%26, %c0_21, %c0_22] : memref<4x8x32xf32, #tpu.memory_space<vmem>>, vector<1x8x32xf32>
    %28 = vector.shape_cast %27 : vector<1x8x32xf32> to vector<8x32xf32>
    %cst_23 = arith.constant dense<0.000000e+00> : vector<8x32xf32>
    %29 = tpu.matmul %25, %12, %cst_23 {dimension_numbers = #tpu.dot_dimension_numbers<[1], [0], [0], [1], [0, 0, 1, 1], [], []>} : vector<8x32xf32>, vector<32x32xf32>, vector<8x32xf32> -> vector<8x32xf32>
    %30 = arith.addf %28, %29 : vector<8x32xf32>
    %31 = math.tanh %30 : vector<8x32xf32>
    %c3_i32 = arith.constant 3 : i32
    %32 = arith.index_cast %c3_i32 : i32 to index
    %c0_24 = arith.constant 0 : index
    %c0_25 = arith.constant 0 : index
    %33 = vector.load %arg14[%32, %c0_24, %c0_25] : memref<4x8x32xf32, #tpu.memory_space<vmem>>, vector<1x8x32xf32>
    %34 = vector.shape_cast %33 : vector<1x8x32xf32> to vector<8x32xf32>
    %cst_26 = arith.constant dense<0.000000e+00> : vector<8x32xf32>
    %35 = tpu.matmul %31, %12, %cst_26 {dimension_numbers = #tpu.dot_dimension_numbers<[1], [0], [0], [1], [0, 0, 1, 1], [], []>} : vector<8x32xf32>, vector<32x32xf32>, vector<8x32xf32> -> vector<8x32xf32>
    %36 = arith.addf %34, %35 : vector<8x32xf32>
    %37 = math.tanh %36 : vector<8x32xf32>
    %c4_i32 = arith.constant 4 : i32
    %c0_27 = arith.constant 0 : index
    %c0_28 = arith.constant 0 : index
    %38 = vector.load %arg13[%c0_27, %c0_28] : memref<8x32xf32, #tpu.memory_space<vmem>>, vector<8x32xf32>
    tpu.vector_store %arg13[%c0_27, %c0_28], %37 {strides = array<i32>} : memref<8x32xf32, #tpu.memory_space<vmem>>, vector<8x32xf32>,
    %c3_i32_29 = arith.constant 3 : i32
    %39 = arith.cmpi eq, %arg0, %c3_i32_29 : i32
    %40 = arith.extui %39 : i1 to i32
    %c0_i32_30 = arith.constant 0 : i32
    %41 = arith.cmpi ne, %40, %c0_i32_30 : i32
    scf.if %41 {
      %c3 = arith.constant 3 : index
      %c0_31 = arith.constant 0 : index
      %c0_32 = arith.constant 0 : index
      %42 = vector.load %arg1[%c3, %c0_31, %c0_32] : memref<4x8x4xf32, #tpu.memory_space<vmem>>, vector<1x8x4xf32>
      %43 = vector.shape_cast %42 : vector<1x8x4xf32> to vector<8x4xf32>
      %c0_33 = arith.constant 0 : index
      %c0_34 = arith.constant 0 : index
      %44 = vector.load %arg6[%c0_33, %c0_34] : memref<4x32xf32, #tpu.memory_space<vmem>>, vector<4x32xf32>
      %cst_35 = arith.constant dense<0.000000e+00> : vector<8x32xf32>
      %45 = tpu.matmul %43, %44, %cst_35 {dimension_numbers = #tpu.dot_dimension_numbers<[1], [0], [0], [1], [0, 0, 1, 1], [], []>} : vector<8x4xf32>, vector<4x32xf32>, vector<8x32xf32> -> vector<8x32xf32>
      %c0_36 = arith.constant 0 : index
      %c0_37 = arith.constant 0 : index
      %46 = vector.load %arg7[%c0_36, %c0_37] : memref<1x32xf32, #tpu.memory_space<vmem>>, vector<1x32xf32>
      %47 = vector.broadcast %46 : vector<1x32xf32> to vector<8x32xf32>
      %48 = arith.addf %45, %47 : vector<8x32xf32>
      %c1 = arith.constant 1 : index
      %c0_38 = arith.constant 0 : index
      %c0_39 = arith.constant 0 : index
      %49 = vector.load %arg2[%c1, %c0_38, %c0_39] : memref<2x8x32xf32, #tpu.memory_space<vmem>>, vector<1x8x32xf32>
      %50 = vector.shape_cast %49 : vector<1x8x32xf32> to vector<8x32xf32>
      %c0_40 = arith.constant 0 : index
      %c0_41 = arith.constant 0 : index
      %51 = vector.load %arg8[%c0_40, %c0_41] : memref<32x32xf32, #tpu.memory_space<vmem>>, vector<32x32xf32>
      %cst_42 = arith.constant dense<0.000000e+00> : vector<8x32xf32>
      %52 = tpu.matmul %50, %51, %cst_42 {dimension_numbers = #tpu.dot_dimension_numbers<[1], [0], [0], [1], [0, 0, 1, 1], [], []>} : vector<8x32xf32>, vector<32x32xf32>, vector<8x32xf32> -> vector<8x32xf32>
      %53 = arith.addf %48, %52 : vector<8x32xf32>
      %54 = math.tanh %53 : vector<8x32xf32>
      %c0_43 = arith.constant 0 : index
      %c0_44 = arith.constant 0 : index
      %55 = vector.load %arg9[%c0_43, %c0_44] : memref<32x4xf32, #tpu.memory_space<vmem>>, vector<32x4xf32>
      %cst_45 = arith.constant dense<0.000000e+00> : vector<8x4xf32>
      %56 = tpu.matmul %37, %55, %cst_45 {dimension_numbers = #tpu.dot_dimension_numbers<[1], [0], [0], [1], [0, 0, 1, 1], [], []>} : vector<8x32xf32>, vector<32x4xf32>, vector<8x4xf32> -> vector<8x4xf32>
      %c0_46 = arith.constant 0 : index
      %c0_47 = arith.constant 0 : index
      %57 = vector.load %arg10[%c0_46, %c0_47] : memref<32x4xf32, #tpu.memory_space<vmem>>, vector<32x4xf32>
      %cst_48 = arith.constant dense<0.000000e+00> : vector<8x4xf32>
      %58 = tpu.matmul %54, %57, %cst_48 {dimension_numbers = #tpu.dot_dimension_numbers<[1], [0], [0], [1], [0, 0, 1, 1], [], []>} : vector<8x32xf32>, vector<32x4xf32>, vector<8x4xf32> -> vector<8x4xf32>
      %59 = arith.addf %56, %58 : vector<8x4xf32>
      %c0_49 = arith.constant 0 : index
      %c0_50 = arith.constant 0 : index
      %60 = vector.load %arg11[%c0_49, %c0_50] : memref<1x4xf32, #tpu.memory_space<vmem>>, vector<1x4xf32>
      %61 = vector.broadcast %60 : vector<1x4xf32> to vector<8x4xf32>
      %62 = arith.addf %59, %61 : vector<8x4xf32>
      %c0_51 = arith.constant 0 : index
      %c0_52 = arith.constant 0 : index
      %63 = vector.load %arg12[%c0_51, %c0_52] : memref<8x4xf32, #tpu.memory_space<vmem>>, vector<8x4xf32>
      tpu.vector_store %arg12[%c0_51, %c0_52], %62 {strides = array<i32>} : memref<8x4xf32, #tpu.memory_space<vmem>>, vector<8x4xf32>,
    } else {
    }
    return
  }
  func.func @transform_0(%arg0: i32) -> (i32, i32, i32) {
    %c0_i32 = arith.constant 0 : i32
    %c0_i32_0 = arith.constant 0 : i32
    %c0_i32_1 = arith.constant 0 : i32
    return %arg0, %c0_i32, %c0_i32_0 : i32, i32, i32
  }
  func.func @transform_1(%arg0: i32) -> (i32, i32, i32) {
    %c0_i32 = arith.constant 0 : i32
    %c0_i32_0 = arith.constant 0 : i32
    %c0_i32_1 = arith.constant 0 : i32
    %c0_i32_2 = arith.constant 0 : i32
    return %c0_i32, %c0_i32_0, %c0_i32_1 : i32, i32, i32
  }
  func.func @transform_2(%arg0: i32) -> (i32, i32) {
    %c0_i32 = arith.constant 0 : i32
    %c0_i32_0 = arith.constant 0 : i32
    %c0_i32_1 = arith.constant 0 : i32
    return %c0_i32, %c0_i32_0 : i32, i32
  }
  func.func @transform_3(%arg0: i32) -> (i32, i32) {
    %c0_i32 = arith.constant 0 : i32
    %c0_i32_0 = arith.constant 0 : i32
    %c0_i32_1 = arith.constant 0 : i32
    return %c0_i32, %c0_i32_0 : i32, i32
  }
  func.func @transform_4(%arg0: i32) -> (i32, i32) {
    %c0_i32 = arith.constant 0 : i32
    %c0_i32_0 = arith.constant 0 : i32
    %c0_i32_1 = arith.constant 0 : i32
    return %c0_i32, %c0_i32_0 : i32, i32
  }
  func.func @transform_5(%arg0: i32) -> (i32, i32) {
    %c0_i32 = arith.constant 0 : i32
    %c0_i32_0 = arith.constant 0 : i32
    %c0_i32_1 = arith.constant 0 : i32
    return %c0_i32, %c0_i32_0 : i32, i32
  }
  func.func @transform_6(%arg0: i32) -> (i32, i32) {
    %c0_i32 = arith.constant 0 : i32
    %c0_i32_0 = arith.constant 0 : i32
    %c0_i32_1 = arith.constant 0 : i32
    return %c0_i32, %c0_i32_0 : i32, i32
  }
  func.func @transform_7(%arg0: i32) -> (i32, i32) {
    %c0_i32 = arith.constant 0 : i32
    %c0_i32_0 = arith.constant 0 : i32
    %c0_i32_1 = arith.constant 0 : i32
    return %c0_i32, %c0_i32_0 : i32, i32
  }
  func.func @transform_8(%arg0: i32) -> (i32, i32) {
    %c0_i32 = arith.constant 0 : i32
    %c0_i32_0 = arith.constant 0 : i32
    %c0_i32_1 = arith.constant 0 : i32
    return %c0_i32, %c0_i32_0 : i32, i32
  }
  func.func @transform_9(%arg0: i32) -> (i32, i32) {
    %c0_i32 = arith.constant 0 : i32
    %c0_i32_0 = arith.constant 0 : i32
    %c0_i32_1 = arith.constant 0 : i32
    return %c0_i32, %c0_i32_0 : i32, i32
  }
  func.func @transform_10(%arg0: i32) -> (i32, i32) {
    %c0_i32 = arith.constant 0 : i32
    %c0_i32_0 = arith.constant 0 : i32
    %c0_i32_1 = arith.constant 0 : i32
    return %c0_i32, %c0_i32_0 : i32, i32
  }
  func.func @transform_11(%arg0: i32) -> (i32, i32) {
    %c0_i32 = arith.constant 0 : i32
    %c0_i32_0 = arith.constant 0 : i32
    %c0_i32_1 = arith.constant 0 : i32
    return %c0_i32, %c0_i32_0 : i32, i32
  }
}

</mosaic_0001>

<llo_original>
// kernel: icarnn_forward.1
$region0: #{icarnn_forward.1}
  #allocation0 [shape = 'u32[]', space=smem, size = 0x4, offset = 0x4, fixed_abs, tag = 'smem constant byte address 0x4 - core index']
  #allocation1 [shape = 'u32[144,128]{1,0:T(1,128)}', space=vmem, size = 0x12000, scoped, tag = 'internal scratch']
  #allocation2 [shape = 'f32[8,32]{1,0:T(8,128)}', space=vmem, size = 0x1000, scoped, tag = 'scratch operand']
  #allocation3 [shape = 'f32[4,8,32]{2,1,0:T(8,128)}', space=vmem, size = 0x4000, scoped, tag = 'scratch operand']
  %s0 = inlined_call_operand.vmem [shape: f32[16,8,4], index: 0, kind: input, shape index: {}]
  %s1 = inlined_call_operand.vmem [shape: f32[2,8,32], index: 1, kind: input, shape index: {}]
  %s2 = inlined_call_operand.vmem [shape: f32[4,32], index: 2, kind: input, shape index: {}]
  %s3 = inlined_call_operand.vmem [shape: f32[1,32], index: 3, kind: input, shape index: {}]
  %s4 = inlined_call_operand.vmem [shape: f32[32,32], index: 4, kind: input, shape index: {}]
  %s5 = inlined_call_operand.vmem [shape: f32[4,32], index: 5, kind: input, shape index: {}]
  %s6 = inlined_call_operand.vmem [shape: f32[1,32], index: 6, kind: input, shape index: {}]
  %s7 = inlined_call_operand.vmem [shape: f32[32,32], index: 7, kind: input, shape index: {}]
  %s8 = inlined_call_operand.vmem [shape: f32[32,4], index: 8, kind: input, shape index: {}]
  %s9 = inlined_call_operand.vmem [shape: f32[32,4], index: 9, kind: input, shape index: {}]
  %s10 = inlined_call_operand.vmem [shape: f32[1,4], index: 10, kind: input, shape index: {}]
  %s11 = inlined_call_operand.vmem [shape: f32[8,4], index: 11, kind: output, shape index: {}]
  %s12 = sld [smem:[#allocation0]]
  $region85: #{icarnn_forward.1} parent=0
    _
  %s14 = ssub.s32 1, %s12
  %s15 = scalar_select 0, %s14, %s12
  loop: start=0, step=1, limit=6
  $region2: #{icarnn_forward.1} parent=0 // loop_pre_header
    _
  $region3: #{icarnn_forward.1} parent=0 // loop_header
    %s17 = sphi 0, %s21
    %p18 = scmp.ge.s32.totalorder %s17, 6
    %s27 = sphi 0, %s29
    %s30 = sphi 0, %s27
    %s31 = sphi 0, %s30
    %s47 = sphi 0, %s31
    %s51 = sphi 0, %s51
    %s53 = sphi 0, %s51
    %s54 = sphi 0, %s53
    %s68 = sphi 0, %s54
    %s72 = sphi 0, %s72
    %s74 = sphi 0, %s72
    %s75 = sphi 0, %s74
    %s89 = sphi 0, %s75
    %s93 = sphi 0, %s93
    %s95 = sphi 0, %s93
    %s96 = sphi 0, %s95
    %s110 = sphi 0, %s96
    %s114 = sphi 0, %s114
    %s116 = sphi 0, %s114
    %s117 = sphi 0, %s116
    %s131 = sphi 0, %s117
    %s135 = sphi 0, %s135
    %s137 = sphi 0, %s135
    %s138 = sphi 0, %s137
    %s152 = sphi 0, %s138
    %s156 = sphi 0, %s156
    %s158 = sphi 0, %s156
    %s159 = sphi 0, %s158
    %s173 = sphi 0, %s159
    %s177 = sphi 0, %s177
    %s179 = sphi 0, %s177
    %s180 = sphi 0, %s179
    %s194 = sphi 0, %s180
    %s198 = sphi 0, %s198
    %s200 = sphi 0, %s198
    %s201 = sphi 0, %s200
    %s215 = sphi 0, %s201
    %s219 = sphi 0, %s219
    %s221 = sphi 0, %s219
    %s222 = sphi 0, %s221
    %s236 = sphi 0, %s222
    %s240 = sphi 0, %s240
    %s242 = sphi 0, %s240
    %s243 = sphi 0, %s242
    %s257 = sphi 0, %s243
    %s261 = sphi 0, %s261
    %s263 = sphi 0, %s261
    %s264 = sphi 0, %s263
    %s278 = sphi 0, %s264
  $region4: #{icarnn_forward.1} parent=0 // loop_header_branch
    %20 = sbr.rel (%p18) target = $region8
  $region5: #{icarnn_forward.1} parent=0 // loop_body
    %s22 = ssub.s32 %s17, 1
    %s23 = ssub.s32 %s17, 2
    %s24 = sadd.s32 %s17, 1
    %s25 = ssub.s32 %s17, %s24
    %p26 = scmp.eq.s32.totalorder %s25, 0
    %s28 = sadd.s32 %s27, 1
    %s29 = scalar_select %p26, %s27, %s28
    %p32 = pneg %p26
    %p33 = scmp.eq.s32.totalorder %s17, 3
    %p34 = por %p32, %p33
    %p35 = scmp.ne.s32.totalorder %s27, %s30
    %p36 = scmp.eq.s32.totalorder %s17, 0
    %p37 = por %p35, %p36
    %p38 = scmp.ne.s32.totalorder %s27, %s30
    %p39 = scmp.eq.s32.totalorder %s22, 3
    %p40 = por %p38, %p39
    %p41 = scmp.ne.s32.totalorder %s30, %s31
    %p42 = scmp.eq.s32.totalorder %s22, 0
    %p43 = por %p41, %p42
    %p44 = scmp.ne.s32.totalorder %s30, %s31
    %p45 = scmp.eq.s32.totalorder %s23, 3
    %p46 = por %p44, %p45
    %p48 = scmp.ne.s32.totalorder %s31, %s47
    %p49 = scmp.eq.s32.totalorder %s23, 0
    %p50 = por %p48, %p49
    %s52 = sadd.s32 %s51, 1
    %p55 = scmp.eq.s32.totalorder %s17, 3
    %p56 = scmp.ne.s32.totalorder %s51, %s53
    %p57 = scmp.eq.s32.totalorder %s17, 0
    %p58 = por %p56, %p57
    %p59 = scmp.ne.s32.totalorder %s51, %s53
    %p60 = scmp.eq.s32.totalorder %s22, 3
    %p61 = por %p59, %p60
    %p62 = scmp.ne.s32.totalorder %s53, %s54
    %p63 = scmp.eq.s32.totalorder %s22, 0
    %p64 = por %p62, %p63
    %p65 = scmp.ne.s32.totalorder %s53, %s54
    %p66 = scmp.eq.s32.totalorder %s23, 3
    %p67 = por %p65, %p66
    %p69 = scmp.ne.s32.totalorder %s54, %s68
    %p70 = scmp.eq.s32.totalorder %s23, 0
    %p71 = por %p69, %p70
    %s73 = sadd.s32 %s72, 1
    %p76 = scmp.eq.s32.totalorder %s17, 3
    %p77 = scmp.ne.s32.totalorder %s72, %s74
    %p78 = scmp.eq.s32.totalorder %s17, 0
    %p79 = por %p77, %p78
    %p80 = scmp.ne.s32.totalorder %s72, %s74
    %p81 = scmp.eq.s32.totalorder %s22, 3
    %p82 = por %p80, %p81
    %p83 = scmp.ne.s32.totalorder %s74, %s75
    %p84 = scmp.eq.s32.totalorder %s22, 0
    %p85 = por %p83, %p84
    %p86 = scmp.ne.s32.totalorder %s74, %s75
    %p87 = scmp.eq.s32.totalorder %s23, 3
    %p88 = por %p86, %p87
    %p90 = scmp.ne.s32.totalorder %s75, %s89
    %p91 = scmp.eq.s32.totalorder %s23, 0
    %p92 = por %p90, %p91
    %s94 = sadd.s32 %s93, 1
    %p97 = scmp.eq.s32.totalorder %s17, 3
    %p98 = scmp.ne.s32.totalorder %s93, %s95
    %p99 = scmp.eq.s32.totalorder %s17, 0
    %p100 = por %p98, %p99
    %p101 = scmp.ne.s32.totalorder %s93, %s95
    %p102 = scmp.eq.s32.totalorder %s22, 3
    %p103 = por %p101, %p102
    %p104 = scmp.ne.s32.totalorder %s95, %s96
    %p105 = scmp.eq.s32.totalorder %s22, 0
    %p106 = por %p104, %p105
    %p107 = scmp.ne.s32.totalorder %s95, %s96
    %p108 = scmp.eq.s32.totalorder %s23, 3
    %p109 = por %p107, %p108
    %p111 = scmp.ne.s32.totalorder %s96, %s110
    %p112 = scmp.eq.s32.totalorder %s23, 0
    %p113 = por %p111, %p112
    %s115 = sadd.s32 %s114, 1
    %p118 = scmp.eq.s32.totalorder %s17, 3
    %p119 = scmp.ne.s32.totalorder %s114, %s116
    %p120 = scmp.eq.s32.totalorder %s17, 0
    %p121 = por %p119, %p120
    %p122 = scmp.ne.s32.totalorder %s114, %s116
    %p123 = scmp.eq.s32.totalorder %s22, 3
    %p124 = por %p122, %p123
    %p125 = scmp.ne.s32.totalorder %s116, %s117
    %p126 = scmp.eq.s32.totalorder %s22, 0
    %p127 = por %p125, %p126
    %p128 = scmp.ne.s32.totalorder %s116, %s117
    %p129 = scmp.eq.s32.totalorder %s23, 3
    %p130 = por %p128, %p129
    %p132 = scmp.ne.s32.totalorder %s117, %s131
    %p133 = scmp.eq.s32.totalorder %s23, 0
    %p134 = por %p132, %p133
    %s136 = sadd.s32 %s135, 1
    %p139 = scmp.eq.s32.totalorder %s17, 3
    %p140 = scmp.ne.s32.totalorder %s135, %s137
    %p141 = scmp.eq.s32.totalorder %s17, 0
    %p142 = por %p140, %p141
    %p143 = scmp.ne.s32.totalorder %s135, %s137
    %p144 = scmp.eq.s32.totalorder %s22, 3
    %p145 = por %p143, %p144
    %p146 = scmp.ne.s32.totalorder %s137, %s138
    %p147 = scmp.eq.s32.totalorder %s22, 0
    %p148 = por %p146, %p147
    %p149 = scmp.ne.s32.totalorder %s137, %s138
    %p150 = scmp.eq.s32.totalorder %s23, 3
    %p151 = por %p149, %p150
    %p153 = scmp.ne.s32.totalorder %s138, %s152
    %p154 = scmp.eq.s32.totalorder %s23, 0
    %p155 = por %p153, %p154
    %s157 = sadd.s32 %s156, 1
    %p160 = scmp.eq.s32.totalorder %s17, 3
    %p161 = scmp.ne.s32.totalorder %s156, %s158
    %p162 = scmp.eq.s32.totalorder %s17, 0
    %p163 = por %p161, %p162
    %p164 = scmp.ne.s32.totalorder %s156, %s158
    %p165 = scmp.eq.s32.totalorder %s22, 3
    %p166 = por %p164, %p165
    %p167 = scmp.ne.s32.totalorder %s158, %s159
    %p168 = scmp.eq.s32.totalorder %s22, 0
    %p169 = por %p167, %p168
    %p170 = scmp.ne.s32.totalorder %s158, %s159
    %p171 = scmp.eq.s32.totalorder %s23, 3
    %p172 = por %p170, %p171
    %p174 = scmp.ne.s32.totalorder %s159, %s173
    %p175 = scmp.eq.s32.totalorder %s23, 0
    %p176 = por %p174, %p175
    %s178 = sadd.s32 %s177, 1
    %p181 = scmp.eq.s32.totalorder %s17, 3
    %p182 = scmp.ne.s32.totalorder %s177, %s179
    %p183 = scmp.eq.s32.totalorder %s17, 0
    %p184 = por %p182, %p183
    %p185 = scmp.ne.s32.totalorder %s177, %s179
    %p186 = scmp.eq.s32.totalorder %s22, 3
    %p187 = por %p185, %p186
    %p188 = scmp.ne.s32.totalorder %s179, %s180
    %p189 = scmp.eq.s32.totalorder %s22, 0
    %p190 = por %p188, %p189
    %p191 = scmp.ne.s32.totalorder %s179, %s180
    %p192 = scmp.eq.s32.totalorder %s23, 3
    %p193 = por %p191, %p192
    %p195 = scmp.ne.s32.totalorder %s180, %s194
    %p196 = scmp.eq.s32.totalorder %s23, 0
    %p197 = por %p195, %p196
    %s199 = sadd.s32 %s198, 1
    %p202 = scmp.eq.s32.totalorder %s17, 3
    %p203 = scmp.ne.s32.totalorder %s198, %s200
    %p204 = scmp.eq.s32.totalorder %s17, 0
    %p205 = por %p203, %p204
    %p206 = scmp.ne.s32.totalorder %s198, %s200
    %p207 = scmp.eq.s32.totalorder %s22, 3
    %p208 = por %p206, %p207
    %p209 = scmp.ne.s32.totalorder %s200, %s201
    %p210 = scmp.eq.s32.totalorder %s22, 0
    %p211 = por %p209, %p210
    %p212 = scmp.ne.s32.totalorder %s200, %s201
    %p213 = scmp.eq.s32.totalorder %s23, 3
    %p214 = por %p212, %p213
    %p216 = scmp.ne.s32.totalorder %s201, %s215
    %p217 = scmp.eq.s32.totalorder %s23, 0
    %p218 = por %p216, %p217
    %s220 = sadd.s32 %s219, 1
    %p223 = scmp.eq.s32.totalorder %s17, 3
    %p224 = scmp.ne.s32.totalorder %s219, %s221
    %p225 = scmp.eq.s32.totalorder %s17, 0
    %p226 = por %p224, %p225
    %p227 = scmp.ne.s32.totalorder %s219, %s221
    %p228 = scmp.eq.s32.totalorder %s22, 3
    %p229 = por %p227, %p228
    %p230 = scmp.ne.s32.totalorder %s221, %s222
    %p231 = scmp.eq.s32.totalorder %s22, 0
    %p232 = por %p230, %p231
    %p233 = scmp.ne.s32.totalorder %s221, %s222
    %p234 = scmp.eq.s32.totalorder %s23, 3
    %p235 = por %p233, %p234
    %p237 = scmp.ne.s32.totalorder %s222, %s236
    %p238 = scmp.eq.s32.totalorder %s23, 0
    %p239 = por %p237, %p238
    %s241 = sadd.s32 %s240, 1
    %p244 = scmp.eq.s32.totalorder %s17, 3
    %p245 = scmp.ne.s32.totalorder %s240, %s242
    %p246 = scmp.eq.s32.totalorder %s17, 0
    %p247 = por %p245, %p246
    %p248 = scmp.ne.s32.totalorder %s240, %s242
    %p249 = scmp.eq.s32.totalorder %s22, 3
    %p250 = por %p248, %p249
    %p251 = scmp.ne.s32.totalorder %s242, %s243
    %p252 = scmp.eq.s32.totalorder %s22, 0
    %p253 = por %p251, %p252
    %p254 = scmp.ne.s32.totalorder %s242, %s243
    %p255 = scmp.eq.s32.totalorder %s23, 3
    %p256 = por %p254, %p255
    %p258 = scmp.ne.s32.totalorder %s243, %s257
    %p259 = scmp.eq.s32.totalorder %s23, 0
    %p260 = por %p258, %p259
    %s262 = sadd.s32 %s261, 1
    %p265 = scmp.eq.s32.totalorder %s17, 3
    %p266 = scmp.ne.s32.totalorder %s261, %s263
    %p267 = scmp.eq.s32.totalorder %s17, 0
    %p268 = por %p266, %p267
    %p269 = scmp.ne.s32.totalorder %s261, %s263
    %p270 = scmp.eq.s32.totalorder %s22, 3
    %p271 = por %p269, %p270
    %p272 = scmp.ne.s32.totalorder %s263, %s264
    %p273 = scmp.eq.s32.totalorder %s22, 0
    %p274 = por %p272, %p273
    %p275 = scmp.ne.s32.totalorder %s263, %s264
    %p276 = scmp.eq.s32.totalorder %s23, 3
    %p277 = por %p275, %p276
    %p279 = scmp.ne.s32.totalorder %s264, %s278
    %p280 = scmp.eq.s32.totalorder %s23, 0
    %p281 = por %p279, %p280
    %p282 = scmp.le.s32.totalorder 1, %s17
    %p283 = scmp.lt.s32.totalorder %s17, 5
    %p284 = pnand %p282, %p283
    %p285 = pneg %p284
    // Predicated region
    $region9: #{icarnn_forward.1} parent=5 // pred_check
      _
    $region10: #{icarnn_forward.1} parent=5 // pred_check_branch
      %287 = sbr.rel (%p284) target = $region12
    $region11: #{icarnn_forward.1} parent=5 // pred_region
      %s288 = ssub.s32 %s17, 1
      // Predicated region
      $region13: #{icarnn_forward.1} parent=11 // pred_check
        %p289 = pneg %p64
      $region14: #{icarnn_forward.1} parent=11 // pred_check_branch
        %291 = sbr.rel (%p289) target = $region16
      $region15: #{icarnn_forward.1} parent=11 // pred_region
        _
      $region16: #{icarnn_forward.1} parent=11 // pred_fallthru
        _
      // Predicated region
      $region17: #{icarnn_forward.1} parent=11 // pred_check
        %p292 = pneg %p85
      $region18: #{icarnn_forward.1} parent=11 // pred_check_branch
        %294 = sbr.rel (%p292) target = $region20
      $region19: #{icarnn_forward.1} parent=11 // pred_region
        _
      $region20: #{icarnn_forward.1} parent=11 // pred_fallthru
        _
      // Predicated region
      $region21: #{icarnn_forward.1} parent=11 // pred_check
        %p295 = pneg %p106
      $region22: #{icarnn_forward.1} parent=11 // pred_check_branch
        %297 = sbr.rel (%p295) target = $region24
      $region23: #{icarnn_forward.1} parent=11 // pred_region
        _
      $region24: #{icarnn_forward.1} parent=11 // pred_fallthru
        _
      // Predicated region
      $region25: #{icarnn_forward.1} parent=11 // pred_check
        %p298 = pneg %p127
      $region26: #{icarnn_forward.1} parent=11 // pred_check_branch
        %300 = sbr.rel (%p298) target = $region28
      $region27: #{icarnn_forward.1} parent=11 // pred_region
        _
      $region28: #{icarnn_forward.1} parent=11 // pred_fallthru
        _
      // Predicated region
      $region29: #{icarnn_forward.1} parent=11 // pred_check
        %p301 = pneg %p148
      $region30: #{icarnn_forward.1} parent=11 // pred_check_branch
        %303 = sbr.rel (%p301) target = $region32
      $region31: #{icarnn_forward.1} parent=11 // pred_region
        _
      $region32: #{icarnn_forward.1} parent=11 // pred_fallthru
        _
      // Predicated region
      $region33: #{icarnn_forward.1} parent=11 // pred_check
        %p304 = pneg %p169
      $region34: #{icarnn_forward.1} parent=11 // pred_check_branch
        %306 = sbr.rel (%p304) target = $region36
      $region35: #{icarnn_forward.1} parent=11 // pred_region
        _
      $region36: #{icarnn_forward.1} parent=11 // pred_fallthru
        _
      // Predicated region
      $region37: #{icarnn_forward.1} parent=11 // pred_check
        %p307 = pneg %p190
      $region38: #{icarnn_forward.1} parent=11 // pred_check_branch
        %309 = sbr.rel (%p307) target = $region40
      $region39: #{icarnn_forward.1} parent=11 // pred_region
        _
      $region40: #{icarnn_forward.1} parent=11 // pred_fallthru
        _
      // Predicated region
      $region41: #{icarnn_forward.1} parent=11 // pred_check
        %p310 = pneg %p211
      $region42: #{icarnn_forward.1} parent=11 // pred_check_branch
        %312 = sbr.rel (%p310) target = $region44
      $region43: #{icarnn_forward.1} parent=11 // pred_region
        _
      $region44: #{icarnn_forward.1} parent=11 // pred_fallthru
        _
      // Predicated region
      $region45: #{icarnn_forward.1} parent=11 // pred_check
        %p313 = pneg %p232
      $region46: #{icarnn_forward.1} parent=11 // pred_check_branch
        %315 = sbr.rel (%p313) target = $region48
      $region47: #{icarnn_forward.1} parent=11 // pred_region
        _
      $region48: #{icarnn_forward.1} parent=11 // pred_fallthru
        _
      // Predicated region
      $region49: #{icarnn_forward.1} parent=11 // pred_check
        %p316 = pneg %p253
      $region50: #{icarnn_forward.1} parent=11 // pred_check_branch
        %318 = sbr.rel (%p316) target = $region52
      $region51: #{icarnn_forward.1} parent=11 // pred_region
        _
      $region52: #{icarnn_forward.1} parent=11 // pred_fallthru
        _
    $region12: #{icarnn_forward.1} parent=5 // pred_fallthru
      _
    %p319 = scmp.lt.s32.totalorder %s17, 4
    // Predicated region
    $region53: #{icarnn_forward.1} parent=5 // pred_check
      %p320 = pneg %p319
    $region54: #{icarnn_forward.1} parent=5 // pred_check_branch
      %322 = sbr.rel (%p320) target = $region56
    $region55: #{icarnn_forward.1} parent=5 // pred_region
      // Predicated region
      $region57: #{icarnn_forward.1} parent=55 // pred_check
        %p323 = pneg %p37
      $region58: #{icarnn_forward.1} parent=55 // pred_check_branch
        %325 = sbr.rel (%p323) target = $region60
      $region59: #{icarnn_forward.1} parent=55 // pred_region
        %s326 = smul.u32 4, %s17
        %p327 = scmp.lt.s32.totalorder %s326, 15
        %s328 = scalar_select %p327, %s326, 15
        %s329 = smul.addr %s328, 8
        %s330 = scalar_lea.vmem %s0, %s329
        %s331 = smul.u32 4, %s17
      $region60: #{icarnn_forward.1} parent=55 // pred_fallthru
        _
    $region56: #{icarnn_forward.1} parent=5 // pred_fallthru
      _
    %p332 = scmp.le.s32.totalorder 1, %s17
    %p333 = scmp.lt.s32.totalorder %s17, 5
    %p334 = pnand %p332, %p333
    %p335 = pneg %p334
    // Predicated region
    $region61: #{icarnn_forward.1} parent=5 // pred_check
      _
    $region62: #{icarnn_forward.1} parent=5 // pred_check_branch
      %337 = sbr.rel (%p334) target = $region64
    $region63: #{icarnn_forward.1} parent=5 // pred_region
      %s338 = ssub.s32 %s17, 1
      %s339 = smul.u32 4, %s22
      %p340 = scmp.lt.s32.totalorder %s339, 15
      %s341 = scalar_select %p340, %s339, 15
      %s342 = smul.addr %s341, 8
      %s343 = scalar_lea.vmem %s0, %s342
      %p344 = pneg %p43
      %p345 = pneg %p40
      %p346 = pneg %p64
      %p347 = pneg %p61
      %p348 = pneg %p85
      %p349 = pneg %p82
      %p350 = pneg %p106
      %p351 = pneg %p103
      %p352 = pneg %p127
      %p353 = pneg %p124
      %p354 = pneg %p148
      %p355 = pneg %p145
      %p356 = pneg %p169
      %p357 = pneg %p166
      %p358 = pneg %p190
      %p359 = pneg %p187
      %p360 = pneg %p211
      %p361 = pneg %p208
      %p362 = pneg %p232
      %p363 = pneg %p229
      %p364 = pneg %p253
      %p365 = pneg %p250
      %p366 = pneg %p274
      %p367 = pneg %p271
      %s368 = smul.u32 4, %s22
      %p369 = scmp.lt.s32.totalorder %s368, 15
      %s370 = scalar_select %p369, %s368, 15
      %s371 = smul.addr %s370, 8
      %s372 = scalar_lea.vmem %s0, %s371
      %s373 = smul.u32 4, %s22
      %p374 = scmp.eq.s32.totalorder %s22, 0
      // Predicated region
      $region65: #{icarnn_forward.1} parent=63 // pred_check
        %p375 = pneg %p374
      $region66: #{icarnn_forward.1} parent=63 // pred_check_branch
        %377 = sbr.rel (%p375) target = $region68
      $region67: #{icarnn_forward.1} parent=63 // pred_region
        %v378 = vld [vmem:[%s1] sm:$0xff]
        %vm379 = vcmask 261120
        %380 = vst.msk [vmem:[#allocation2] sm:$0xff] %vm379, %v378
      $region68: #{icarnn_forward.1} parent=63 // pred_fallthru
        _
      %v381 = vld [vmem:[%s372] sm:$0xff]
      %v382 = vld [vmem:[%s372 + $0x8] sm:$0xff]
      %v383 = vld [vmem:[%s372 + $0x10] sm:$0xff]
      %v384 = vld [vmem:[%s372 + $0x18] sm:$0xff]
      %v385 = vld [vmem:[%s2] sm:$0xf]
      %v386 = vld [vmem:[%s3] sm:$0x1]
      %v388 = vlaneseq
      %v389 = vshrl.u32 %v388, 7
      %v390 = vsub.s32 0, %v389
      %v391 = vrot.slane %v386, %v390
      %vm393 = vcmask 31744
      %v395 = vsel %vm393, %v381, 0
      %v398 = vsel %vm393, %v382, 0
      %v401 = vsel %vm393, %v383, 0
      %v404 = vsel %vm393, %v384, 0
      %vm406 = vcmask 1043456
      %v408 = vsel %vm406, %v385, 0
      %410 = vmatprep.subr.mxu0 0.0
      %411 = vmatpush1.msra.mxu0 0.0
      %412 = vmatprep.subr.mxu0 0.0
      %413 = vmatpush1.msra.mxu0 0.0
      %414 = vmatprep.subr.mxu0 0.0
      %415 = vmatpush1.msra.mxu0 0.0
      %416 = vmatprep.subr.mxu0 0.0
      %417 = vmatpush1.msra.mxu0 0.0
      %418 = vmatprep.subr.mxu0 0.0
      %419 = vmatpush1.msra.mxu0 0.0
      %420 = vmatprep.subr.mxu0 0.0
      %421 = vmatpush1.msra.mxu0 0.0
      %422 = vmatprep.subr.mxu0 0.0
      %423 = vmatpush1.msra.mxu0 0.0
      %424 = vmatprep.subr.mxu0 0.0
      %425 = vmatpush1.msra.mxu0 0.0
      %426 = vmatprep.subr.mxu0 0.0
      %427 = vmatpush1.msra.mxu0 0.0
      %428 = vmatprep.subr.mxu0 0.0
      %429 = vmatpush1.msra.mxu0 0.0
      %430 = vmatprep.subr.mxu0 0.0
      %431 = vmatpush1.msra.mxu0 0.0
      %432 = vmatprep.subr.mxu0 0.0
      %433 = vmatpush1.msra.mxu0 0.0
      %434 = vmatprep.subr.mxu0 0.0
      %435 = vmatpush1.msra.mxu0 0.0
      %436 = vmatprep.subr.mxu0 0.0
      %437 = vmatpush1.msra.mxu0 0.0
      %438 = vmatprep.subr.mxu0 0.0
      %439 = vmatpush1.msra.mxu0 0.0
      %440 = vmatprep.subr.mxu0 0.0
      %441 = vmatpush1.msra.mxu0 %v408
      %442 = vmatprep.subr.mxu0 0.0
      %443 = vmatpush2.msra.mxu0 0.0
      %444 = vmatprep.subr.mxu0 0.0
      %445 = vmatpush2.msra.mxu0 0.0
      %446 = vmatprep.subr.mxu0 0.0
      %447 = vmatpush2.msra.mxu0 0.0
      %448 = vmatprep.subr.mxu0 0.0
      %449 = vmatpush2.msra.mxu0 0.0
      %450 = vmatprep.subr.mxu0 0.0
      %451 = vmatpush2.msra.mxu0 0.0
      %452 = vmatprep.subr.mxu0 0.0
      %453 = vmatpush2.msra.mxu0 0.0
      %454 = vmatprep.subr.mxu0 0.0
      %455 = vmatpush2.msra.mxu0 0.0
      %456 = vmatprep.subr.mxu0 0.0
      %457 = vmatpush2.msra.mxu0 0.0
      %458 = vmatprep.subr.mxu0 0.0
      %459 = vmatpush2.msra.mxu0 0.0
      %460 = vmatprep.subr.mxu0 0.0
      %461 = vmatpush2.msra.mxu0 0.0
      %462 = vmatprep.subr.mxu0 0.0
      %463 = vmatpush2.msra.mxu0 0.0
      %464 = vmatprep.subr.mxu0 0.0
      %465 = vmatpush2.msra.mxu0 0.0
      %466 = vmatprep.subr.mxu0 0.0
      %467 = vmatpush2.msra.mxu0 0.0
      %468 = vmatprep.subr.mxu0 0.0
      %469 = vmatpush2.msra.mxu0 0.0
      %470 = vmatprep.subr.mxu0 0.0
      %471 = vmatpush2.msra.mxu0 0.0
      %472 = vmatprep.subr.mxu0 0.0
      %473 = vmatpush2.msra.mxu0 0.0
      %474 = vmatprep.mubr.f32.mxu0 0.0
      %475 = vmatmul.mubr.f32.gmra.mxu0 %v395
      %v476 = vpop.f32.mrf.mxu0
      %v477 = vadd.f32 %v391, %v476
      %v478 = vpop.f32.mrf.mxu0
      %479 = vmatprep.mubr.f32.mxu0 0.0
      %480 = vmatmul.mubr.f32.gmra.mxu0 %v398
      %v481 = vpop.f32.mrf.mxu0
      %v482 = vadd.f32 %v391, %v481
      %v483 = vpop.f32.mrf.mxu0
      %484 = vmatprep.mubr.f32.mxu0 0.0
      %485 = vmatmul.mubr.f32.gmra.mxu0 %v401
      %v486 = vpop.f32.mrf.mxu0
      %v487 = vadd.f32 %v391, %v486
      %v488 = vpop.f32.mrf.mxu0
      %489 = vmatprep.mubr.f32.mxu0 0.0
      %490 = vmatmul.mubr.f32.gmra.mxu0 %v404
      %v491 = vpop.f32.mrf.mxu0
      %v492 = vadd.f32 %v391, %v491
      %v493 = vpop.f32.mrf.mxu0
      %494 = vdwg.mxu0
      %vm495 = vcmask 261120
      %496 = vst.msk [vmem:[#allocation3] sm:$0xff] %vm495, %v477
      %497 = vst.msk [vmem:[#allocation3 + $0x8] sm:$0xff] %vm495, %v482
      %498 = vst.msk [vmem:[#allocation3 + $0x10] sm:$0xff] %vm495, %v487
      %499 = vst.msk [vmem:[#allocation3 + $0x18] sm:$0xff] %vm495, %v492
      %v500 = vld [vmem:[%s4] sm:$0xff]
      %v501 = vld [vmem:[%s4 + $0x8] sm:$0xff]
      %v502 = vld [vmem:[%s4 + $0x10] sm:$0xff]
      %v503 = vld [vmem:[%s4 + $0x18] sm:$0xff]
      %v504 = vld [vmem:[#allocation2] sm:$0xff]
      %v505 = vld [vmem:[#allocation3] sm:$0xff]
      %v507 = vsel %vm495, %v504, 0
      %509 = vmatprep.subr.mxu0 0.0
      %510 = vmatpush1.msra.mxu0 0.0
      %511 = vmatprep.subr.mxu0 0.0
      %512 = vmatpush1.msra.mxu0 0.0
      %513 = vmatprep.subr.mxu0 0.0
      %514 = vmatpush1.msra.mxu0 0.0
      %515 = vmatprep.subr.mxu0 0.0
      %516 = vmatpush1.msra.mxu0 0.0
      %517 = vmatprep.subr.mxu0 0.0
      %518 = vmatpush1.msra.mxu0 0.0
      %519 = vmatprep.subr.mxu0 0.0
      %520 = vmatpush1.msra.mxu0 0.0
      %521 = vmatprep.subr.mxu0 0.0
      %522 = vmatpush1.msra.mxu0 0.0
      %523 = vmatprep.subr.mxu0 0.0
      %524 = vmatpush1.msra.mxu0 0.0
      %525 = vmatprep.subr.mxu0 0.0
      %526 = vmatpush1.msra.mxu0 0.0
      %527 = vmatprep.subr.mxu0 0.0
      %528 = vmatpush1.msra.mxu0 0.0
      %529 = vmatprep.subr.mxu0 0.0
      %530 = vmatpush1.msra.mxu0 0.0
      %531 = vmatprep.subr.mxu0 0.0
      %532 = vmatpush1.msra.mxu0 0.0
      %533 = vmatprep.subr.mxu0 0.0
      %534 = vmatpush1.msra.mxu0 %v503
      %535 = vmatprep.subr.mxu0 0.0
      %536 = vmatpush1.msra.mxu0 %v502
      %537 = vmatprep.subr.mxu0 0.0
      %538 = vmatpush1.msra.mxu0 %v501
      %539 = vmatprep.subr.mxu0 0.0
      %540 = vmatpush1.msra.mxu0 %v500
      %541 = vmatprep.subr.mxu0 0.0
      %542 = vmatpush2.msra.mxu0 0.0
      %543 = vmatprep.subr.mxu0 0.0
      %544 = vmatpush2.msra.mxu0 0.0
      %545 = vmatprep.subr.mxu0 0.0
      %546 = vmatpush2.msra.mxu0 0.0
      %547 = vmatprep.subr.mxu0 0.0
      %548 = vmatpush2.msra.mxu0 0.0
      %549 = vmatprep.subr.mxu0 0.0
      %550 = vmatpush2.msra.mxu0 0.0
      %551 = vmatprep.subr.mxu0 0.0
      %552 = vmatpush2.msra.mxu0 0.0
      %553 = vmatprep.subr.mxu0 0.0
      %554 = vmatpush2.msra.mxu0 0.0
      %555 = vmatprep.subr.mxu0 0.0
      %556 = vmatpush2.msra.mxu0 0.0
      %557 = vmatprep.subr.mxu0 0.0
      %558 = vmatpush2.msra.mxu0 0.0
      %559 = vmatprep.subr.mxu0 0.0
      %560 = vmatpush2.msra.mxu0 0.0
      %561 = vmatprep.subr.mxu0 0.0
      %562 = vmatpush2.msra.mxu0 0.0
      %563 = vmatprep.subr.mxu0 0.0
      %564 = vmatpush2.msra.mxu0 0.0
      %565 = vmatprep.subr.mxu0 0.0
      %566 = vmatpush2.msra.mxu0 0.0
      %567 = vmatprep.subr.mxu0 0.0
      %568 = vmatpush2.msra.mxu0 0.0
      %569 = vmatprep.subr.mxu0 0.0
      %570 = vmatpush2.msra.mxu0 0.0
      %571 = vmatprep.subr.mxu0 0.0
      %572 = vmatpush2.msra.mxu0 0.0
      %573 = vmatprep.mubr.f32.mxu0 0.0
      %574 = vmatmul.mubr.f32.gmra.mxu0 %v507
      %v575 = vpop.f32.mrf.mxu0
      %v576 = vadd.f32 0.0, %v575
      %v577 = vpop.f32.mrf.mxu0
      %578 = vdwg.mxu0
      %v579 = vadd.f32 %v505, %v576
      %v580 = vtanh.pop %v579
      %s581 = scalar_lea.vmem [#allocation3], 8
      %v582 = vld [vmem:[%s581] sm:$0xff]
      %v584 = vsel %vm495, %v580, 0
      %586 = vmatprep.subr.mxu0 0.0
      %587 = vmatpush1.msra.mxu0 0.0
      %588 = vmatprep.subr.mxu0 0.0
      %589 = vmatpush1.msra.mxu0 0.0
      %590 = vmatprep.subr.mxu0 0.0
      %591 = vmatpush1.msra.mxu0 0.0
      %592 = vmatprep.subr.mxu0 0.0
      %593 = vmatpush1.msra.mxu0 0.0
      %594 = vmatprep.subr.mxu0 0.0
      %595 = vmatpush1.msra.mxu0 0.0
      %596 = vmatprep.subr.mxu0 0.0
      %597 = vmatpush1.msra.mxu0 0.0
      %598 = vmatprep.subr.mxu0 0.0
      %599 = vmatpush1.msra.mxu0 0.0
      %600 = vmatprep.subr.mxu0 0.0
      %601 = vmatpush1.msra.mxu0 0.0
      %602 = vmatprep.subr.mxu0 0.0
      %603 = vmatpush1.msra.mxu0 0.0
      %604 = vmatprep.subr.mxu0 0.0
      %605 = vmatpush1.msra.mxu0 0.0
      %606 = vmatprep.subr.mxu0 0.0
      %607 = vmatpush1.msra.mxu0 0.0
      %608 = vmatprep.subr.mxu0 0.0
      %609 = vmatpush1.msra.mxu0 0.0
      %610 = vmatprep.subr.mxu0 0.0
      %611 = vmatpush1.msra.mxu0 %v503
      %612 = vmatprep.subr.mxu0 0.0
      %613 = vmatpush1.msra.mxu0 %v502
      %614 = vmatprep.subr.mxu0 0.0
      %615 = vmatpush1.msra.mxu0 %v501
      %616 = vmatprep.subr.mxu0 0.0
      %617 = vmatpush1.msra.mxu0 %v500
      %618 = vmatprep.subr.mxu0 0.0
      %619 = vmatpush2.msra.mxu0 0.0
      %620 = vmatprep.subr.mxu0 0.0
      %621 = vmatpush2.msra.mxu0 0.0
      %622 = vmatprep.subr.mxu0 0.0
      %623 = vmatpush2.msra.mxu0 0.0
      %624 = vmatprep.subr.mxu0 0.0
      %625 = vmatpush2.msra.mxu0 0.0
      %626 = vmatprep.subr.mxu0 0.0
      %627 = vmatpush2.msra.mxu0 0.0
      %628 = vmatprep.subr.mxu0 0.0
      %629 = vmatpush2.msra.mxu0 0.0
      %630 = vmatprep.subr.mxu0 0.0
      %631 = vmatpush2.msra.mxu0 0.0
      %632 = vmatprep.subr.mxu0 0.0
      %633 = vmatpush2.msra.mxu0 0.0
      %634 = vmatprep.subr.mxu0 0.0
      %635 = vmatpush2.msra.mxu0 0.0
      %636 = vmatprep.subr.mxu0 0.0
      %637 = vmatpush2.msra.mxu0 0.0
      %638 = vmatprep.subr.mxu0 0.0
      %639 = vmatpush2.msra.mxu0 0.0
      %640 = vmatprep.subr.mxu0 0.0
      %641 = vmatpush2.msra.mxu0 0.0
      %642 = vmatprep.subr.mxu0 0.0
      %643 = vmatpush2.msra.mxu0 0.0
      %644 = vmatprep.subr.mxu0 0.0
      %645 = vmatpush2.msra.mxu0 0.0
      %646 = vmatprep.subr.mxu0 0.0
      %647 = vmatpush2.msra.mxu0 0.0
      %648 = vmatprep.subr.mxu0 0.0
      %649 = vmatpush2.msra.mxu0 0.0
      %650 = vmatprep.mubr.f32.mxu0 0.0
      %651 = vmatmul.mubr.f32.gmra.mxu0 %v584
      %v652 = vpop.f32.mrf.mxu0
      %v653 = vadd.f32 0.0, %v652
      %v654 = vpop.f32.mrf.mxu0
      %655 = vdwg.mxu0
      %v656 = vadd.f32 %v582, %v653
      %v657 = vtanh.pop %v656
      %s658 = scalar_lea.vmem [#allocation3], 16
      %v659 = vld [vmem:[%s658] sm:$0xff]
      %v661 = vsel %vm495, %v657, 0
      %663 = vmatprep.subr.mxu0 0.0
      %664 = vmatpush1.msra.mxu0 0.0
      %665 = vmatprep.subr.mxu0 0.0
      %666 = vmatpush1.msra.mxu0 0.0
      %667 = vmatprep.subr.mxu0 0.0
      %668 = vmatpush1.msra.mxu0 0.0
      %669 = vmatprep.subr.mxu0 0.0
      %670 = vmatpush1.msra.mxu0 0.0
      %671 = vmatprep.subr.mxu0 0.0
      %672 = vmatpush1.msra.mxu0 0.0
      %673 = vmatprep.subr.mxu0 0.0
      %674 = vmatpush1.msra.mxu0 0.0
      %675 = vmatprep.subr.mxu0 0.0
      %676 = vmatpush1.msra.mxu0 0.0
      %677 = vmatprep.subr.mxu0 0.0
      %678 = vmatpush1.msra.mxu0 0.0
      %679 = vmatprep.subr.mxu0 0.0
      %680 = vmatpush1.msra.mxu0 0.0
      %681 = vmatprep.subr.mxu0 0.0
      %682 = vmatpush1.msra.mxu0 0.0
      %683 = vmatprep.subr.mxu0 0.0
      %684 = vmatpush1.msra.mxu0 0.0
      %685 = vmatprep.subr.mxu0 0.0
      %686 = vmatpush1.msra.mxu0 0.0
      %687 = vmatprep.subr.mxu0 0.0
      %688 = vmatpush1.msra.mxu0 %v503
      %689 = vmatprep.subr.mxu0 0.0
      %690 = vmatpush1.msra.mxu0 %v502
      %691 = vmatprep.subr.mxu0 0.0
      %692 = vmatpush1.msra.mxu0 %v501
      %693 = vmatprep.subr.mxu0 0.0
      %694 = vmatpush1.msra.mxu0 %v500
      %695 = vmatprep.subr.mxu0 0.0
      %696 = vmatpush2.msra.mxu0 0.0
      %697 = vmatprep.subr.mxu0 0.0
      %698 = vmatpush2.msra.mxu0 0.0
      %699 = vmatprep.subr.mxu0 0.0
      %700 = vmatpush2.msra.mxu0 0.0
      %701 = vmatprep.subr.mxu0 0.0
      %702 = vmatpush2.msra.mxu0 0.0
      %703 = vmatprep.subr.mxu0 0.0
      %704 = vmatpush2.msra.mxu0 0.0
      %705 = vmatprep.subr.mxu0 0.0
      %706 = vmatpush2.msra.mxu0 0.0
      %707 = vmatprep.subr.mxu0 0.0
      %708 = vmatpush2.msra.mxu0 0.0
      %709 = vmatprep.subr.mxu0 0.0
      %710 = vmatpush2.msra.mxu0 0.0
      %711 = vmatprep.subr.mxu0 0.0
      %712 = vmatpush2.msra.mxu0 0.0
      %713 = vmatprep.subr.mxu0 0.0
      %714 = vmatpush2.msra.mxu0 0.0
      %715 = vmatprep.subr.mxu0 0.0
      %716 = vmatpush2.msra.mxu0 0.0
      %717 = vmatprep.subr.mxu0 0.0
      %718 = vmatpush2.msra.mxu0 0.0
      %719 = vmatprep.subr.mxu0 0.0
      %720 = vmatpush2.msra.mxu0 0.0
      %721 = vmatprep.subr.mxu0 0.0
      %722 = vmatpush2.msra.mxu0 0.0
      %723 = vmatprep.subr.mxu0 0.0
      %724 = vmatpush2.msra.mxu0 0.0
      %725 = vmatprep.subr.mxu0 0.0
      %726 = vmatpush2.msra.mxu0 0.0
      %727 = vmatprep.mubr.f32.mxu0 0.0
      %728 = vmatmul.mubr.f32.gmra.mxu0 %v661
      %v729 = vpop.f32.mrf.mxu0
      %v730 = vadd.f32 0.0, %v729
      %v731 = vpop.f32.mrf.mxu0
      %732 = vdwg.mxu0
      %v733 = vadd.f32 %v659, %v730
      %v734 = vtanh.pop %v733
      %s735 = scalar_lea.vmem [#allocation3], 24
      %v736 = vld [vmem:[%s735] sm:$0xff]
      %v738 = vsel %vm495, %v734, 0
      %740 = vmatprep.subr.mxu0 0.0
      %741 = vmatpush1.msra.mxu0 0.0
      %742 = vmatprep.subr.mxu0 0.0
      %743 = vmatpush1.msra.mxu0 0.0
      %744 = vmatprep.subr.mxu0 0.0
      %745 = vmatpush1.msra.mxu0 0.0
      %746 = vmatprep.subr.mxu0 0.0
      %747 = vmatpush1.msra.mxu0 0.0
      %748 = vmatprep.subr.mxu0 0.0
      %749 = vmatpush1.msra.mxu0 0.0
      %750 = vmatprep.subr.mxu0 0.0
      %751 = vmatpush1.msra.mxu0 0.0
      %752 = vmatprep.subr.mxu0 0.0
      %753 = vmatpush1.msra.mxu0 0.0
      %754 = vmatprep.subr.mxu0 0.0
      %755 = vmatpush1.msra.mxu0 0.0
      %756 = vmatprep.subr.mxu0 0.0
      %757 = vmatpush1.msra.mxu0 0.0
      %758 = vmatprep.subr.mxu0 0.0
      %759 = vmatpush1.msra.mxu0 0.0
      %760 = vmatprep.subr.mxu0 0.0
      %761 = vmatpush1.msra.mxu0 0.0
      %762 = vmatprep.subr.mxu0 0.0
      %763 = vmatpush1.msra.mxu0 0.0
      %764 = vmatprep.subr.mxu0 0.0
      %765 = vmatpush1.msra.mxu0 %v503
      %766 = vmatprep.subr.mxu0 0.0
      %767 = vmatpush1.msra.mxu0 %v502
      %768 = vmatprep.subr.mxu0 0.0
      %769 = vmatpush1.msra.mxu0 %v501
      %770 = vmatprep.subr.mxu0 0.0
      %771 = vmatpush1.msra.mxu0 %v500
      %772 = vmatprep.subr.mxu0 0.0
      %773 = vmatpush2.msra.mxu0 0.0
      %774 = vmatprep.subr.mxu0 0.0
      %775 = vmatpush2.msra.mxu0 0.0
      %776 = vmatprep.subr.mxu0 0.0
      %777 = vmatpush2.msra.mxu0 0.0
      %778 = vmatprep.subr.mxu0 0.0
      %779 = vmatpush2.msra.mxu0 0.0
      %780 = vmatprep.subr.mxu0 0.0
      %781 = vmatpush2.msra.mxu0 0.0
      %782 = vmatprep.subr.mxu0 0.0
      %783 = vmatpush2.msra.mxu0 0.0
      %784 = vmatprep.subr.mxu0 0.0
      %785 = vmatpush2.msra.mxu0 0.0
      %786 = vmatprep.subr.mxu0 0.0
      %787 = vmatpush2.msra.mxu0 0.0
      %788 = vmatprep.subr.mxu0 0.0
      %789 = vmatpush2.msra.mxu0 0.0
      %790 = vmatprep.subr.mxu0 0.0
      %791 = vmatpush2.msra.mxu0 0.0
      %792 = vmatprep.subr.mxu0 0.0
      %793 = vmatpush2.msra.mxu0 0.0
      %794 = vmatprep.subr.mxu0 0.0
      %795 = vmatpush2.msra.mxu0 0.0
      %796 = vmatprep.subr.mxu0 0.0
      %797 = vmatpush2.msra.mxu0 0.0
      %798 = vmatprep.subr.mxu0 0.0
      %799 = vmatpush2.msra.mxu0 0.0
      %800 = vmatprep.subr.mxu0 0.0
      %801 = vmatpush2.msra.mxu0 0.0
      %802 = vmatprep.subr.mxu0 0.0
      %803 = vmatpush2.msra.mxu0 0.0
      %804 = vmatprep.mubr.f32.mxu0 0.0
      %805 = vmatmul.mubr.f32.gmra.mxu0 %v738
      %v806 = vpop.f32.mrf.mxu0
      %v807 = vadd.f32 0.0, %v806
      %v808 = vpop.f32.mrf.mxu0
      %809 = vdwg.mxu0
      %v810 = vadd.f32 %v736, %v807
      %v811 = vtanh.pop %v810
      %812 = vst.msk [vmem:[#allocation2] sm:$0xff] %vm495, %v811
      %p813 = scmp.eq.s32.totalorder %s22, 3
      // Predicated region
      $region69: #{icarnn_forward.1} parent=63 // pred_check
        %p814 = pneg %p813
      $region70: #{icarnn_forward.1} parent=63 // pred_check_branch
        %816 = sbr.rel (%p814) target = $region72
      $region71: #{icarnn_forward.1} parent=63 // pred_region
        %s817 = scalar_lea.vmem %s372, 24
        %v818 = vld [vmem:[%s817] sm:$0xff]
        %v819 = vld [vmem:[%s5] sm:$0xf]
        %v820 = vld [vmem:[%s6] sm:$0x1]
        %v822 = vlaneseq
        %v823 = vshrl.u32 %v822, 7
        %v824 = vsub.s32 0, %v823
        %v825 = vrot.slane %v820, %v824
        %v828 = vsel %vm393, %v818, 0
        %v831 = vsel %vm406, %v819, 0
        %833 = vmatprep.subr.mxu0 0.0
        %834 = vmatpush1.msra.mxu0 0.0
        %835 = vmatprep.subr.mxu0 0.0
        %836 = vmatpush1.msra.mxu0 0.0
        %837 = vmatprep.subr.mxu0 0.0
        %838 = vmatpush1.msra.mxu0 0.0
        %839 = vmatprep.subr.mxu0 0.0
        %840 = vmatpush1.msra.mxu0 0.0
        %841 = vmatprep.subr.mxu0 0.0
        %842 = vmatpush1.msra.mxu0 0.0
        %843 = vmatprep.subr.mxu0 0.0
        %844 = vmatpush1.msra.mxu0 0.0
        %845 = vmatprep.subr.mxu0 0.0
        %846 = vmatpush1.msra.mxu0 0.0
        %847 = vmatprep.subr.mxu0 0.0
        %848 = vmatpush1.msra.mxu0 0.0
        %849 = vmatprep.subr.mxu0 0.0
        %850 = vmatpush1.msra.mxu0 0.0
        %851 = vmatprep.subr.mxu0 0.0
        %852 = vmatpush1.msra.mxu0 0.0
        %853 = vmatprep.subr.mxu0 0.0
        %854 = vmatpush1.msra.mxu0 0.0
        %855 = vmatprep.subr.mxu0 0.0
        %856 = vmatpush1.msra.mxu0 0.0
        %857 = vmatprep.subr.mxu0 0.0
        %858 = vmatpush1.msra.mxu0 0.0
        %859 = vmatprep.subr.mxu0 0.0
        %860 = vmatpush1.msra.mxu0 0.0
        %861 = vmatprep.subr.mxu0 0.0
        %862 = vmatpush1.msra.mxu0 0.0
        %863 = vmatprep.subr.mxu0 0.0
        %864 = vmatpush1.msra.mxu0 %v831
        %865 = vmatprep.subr.mxu0 0.0
        %866 = vmatpush2.msra.mxu0 0.0
        %867 = vmatprep.subr.mxu0 0.0
        %868 = vmatpush2.msra.mxu0 0.0
        %869 = vmatprep.subr.mxu0 0.0
        %870 = vmatpush2.msra.mxu0 0.0
        %871 = vmatprep.subr.mxu0 0.0
        %872 = vmatpush2.msra.mxu0 0.0
        %873 = vmatprep.subr.mxu0 0.0
        %874 = vmatpush2.msra.mxu0 0.0
        %875 = vmatprep.subr.mxu0 0.0
        %876 = vmatpush2.msra.mxu0 0.0
        %877 = vmatprep.subr.mxu0 0.0
        %878 = vmatpush2.msra.mxu0 0.0
        %879 = vmatprep.subr.mxu0 0.0
        %880 = vmatpush2.msra.mxu0 0.0
        %881 = vmatprep.subr.mxu0 0.0
        %882 = vmatpush2.msra.mxu0 0.0
        %883 = vmatprep.subr.mxu0 0.0
        %884 = vmatpush2.msra.mxu0 0.0
        %885 = vmatprep.subr.mxu0 0.0
        %886 = vmatpush2.msra.mxu0 0.0
        %887 = vmatprep.subr.mxu0 0.0
        %888 = vmatpush2.msra.mxu0 0.0
        %889 = vmatprep.subr.mxu0 0.0
        %890 = vmatpush2.msra.mxu0 0.0
        %891 = vmatprep.subr.mxu0 0.0
        %892 = vmatpush2.msra.mxu0 0.0
        %893 = vmatprep.subr.mxu0 0.0
        %894 = vmatpush2.msra.mxu0 0.0
        %895 = vmatprep.subr.mxu0 0.0
        %896 = vmatpush2.msra.mxu0 0.0
        %897 = vmatprep.mubr.f32.mxu0 0.0
        %898 = vmatmul.mubr.f32.gmra.mxu0 %v828
        %v899 = vpop.f32.mrf.mxu0
        %v900 = vadd.f32 %v825, %v899
        %v901 = vpop.f32.mrf.mxu0
        %902 = vdwg.mxu0
        %s903 = scalar_lea.vmem %s1, 8
        %v904 = vld [vmem:[%s903] sm:$0xff]
        %v905 = vld [vmem:[%s7] sm:$0xff]
        %v906 = vld [vmem:[%s7 + $0x8] sm:$0xff]
        %v907 = vld [vmem:[%s7 + $0x10] sm:$0xff]
        %v908 = vld [vmem:[%s7 + $0x18] sm:$0xff]
        %v910 = vsel %vm495, %v904, 0
        %912 = vmatprep.subr.mxu0 0.0
        %913 = vmatpush1.msra.mxu0 0.0
        %914 = vmatprep.subr.mxu0 0.0
        %915 = vmatpush1.msra.mxu0 0.0
        %916 = vmatprep.subr.mxu0 0.0
        %917 = vmatpush1.msra.mxu0 0.0
        %918 = vmatprep.subr.mxu0 0.0
        %919 = vmatpush1.msra.mxu0 0.0
        %920 = vmatprep.subr.mxu0 0.0
        %921 = vmatpush1.msra.mxu0 0.0
        %922 = vmatprep.subr.mxu0 0.0
        %923 = vmatpush1.msra.mxu0 0.0
        %924 = vmatprep.subr.mxu0 0.0
        %925 = vmatpush1.msra.mxu0 0.0
        %926 = vmatprep.subr.mxu0 0.0
        %927 = vmatpush1.msra.mxu0 0.0
        %928 = vmatprep.subr.mxu0 0.0
        %929 = vmatpush1.msra.mxu0 0.0
        %930 = vmatprep.subr.mxu0 0.0
        %931 = vmatpush1.msra.mxu0 0.0
        %932 = vmatprep.subr.mxu0 0.0
        %933 = vmatpush1.msra.mxu0 0.0
        %934 = vmatprep.subr.mxu0 0.0
        %935 = vmatpush1.msra.mxu0 0.0
        %936 = vmatprep.subr.mxu0 0.0
        %937 = vmatpush1.msra.mxu0 %v908
        %938 = vmatprep.subr.mxu0 0.0
        %939 = vmatpush1.msra.mxu0 %v907
        %940 = vmatprep.subr.mxu0 0.0
        %941 = vmatpush1.msra.mxu0 %v906
        %942 = vmatprep.subr.mxu0 0.0
        %943 = vmatpush1.msra.mxu0 %v905
        %944 = vmatprep.subr.mxu0 0.0
        %945 = vmatpush2.msra.mxu0 0.0
        %946 = vmatprep.subr.mxu0 0.0
        %947 = vmatpush2.msra.mxu0 0.0
        %948 = vmatprep.subr.mxu0 0.0
        %949 = vmatpush2.msra.mxu0 0.0
        %950 = vmatprep.subr.mxu0 0.0
        %951 = vmatpush2.msra.mxu0 0.0
        %952 = vmatprep.subr.mxu0 0.0
        %953 = vmatpush2.msra.mxu0 0.0
        %954 = vmatprep.subr.mxu0 0.0
        %955 = vmatpush2.msra.mxu0 0.0
        %956 = vmatprep.subr.mxu0 0.0
        %957 = vmatpush2.msra.mxu0 0.0
        %958 = vmatprep.subr.mxu0 0.0
        %959 = vmatpush2.msra.mxu0 0.0
        %960 = vmatprep.subr.mxu0 0.0
        %961 = vmatpush2.msra.mxu0 0.0
        %962 = vmatprep.subr.mxu0 0.0
        %963 = vmatpush2.msra.mxu0 0.0
        %964 = vmatprep.subr.mxu0 0.0
        %965 = vmatpush2.msra.mxu0 0.0
        %966 = vmatprep.subr.mxu0 0.0
        %967 = vmatpush2.msra.mxu0 0.0
        %968 = vmatprep.subr.mxu0 0.0
        %969 = vmatpush2.msra.mxu0 0.0
        %970 = vmatprep.subr.mxu0 0.0
        %971 = vmatpush2.msra.mxu0 0.0
        %972 = vmatprep.subr.mxu0 0.0
        %973 = vmatpush2.msra.mxu0 0.0
        %974 = vmatprep.subr.mxu0 0.0
        %975 = vmatpush2.msra.mxu0 0.0
        %976 = vmatprep.mubr.f32.mxu0 0.0
        %977 = vmatmul.mubr.f32.gmra.mxu0 %v910
        %v978 = vpop.f32.mrf.mxu0
        %v979 = vadd.f32 0.0, %v978
        %v980 = vpop.f32.mrf.mxu0
        %981 = vdwg.mxu0
        %v982 = vadd.f32 %v900, %v979
        %v983 = vtanh.pop %v982
        %v984 = vld [vmem:[%s8] sm:$0xff]
        %v985 = vld [vmem:[%s8 + $0x8] sm:$0xff]
        %v986 = vld [vmem:[%s8 + $0x10] sm:$0xff]
        %v987 = vld [vmem:[%s8 + $0x18] sm:$0xff]
        %v988 = vld [vmem:[%s9] sm:$0xff]
        %v989 = vld [vmem:[%s9 + $0x8] sm:$0xff]
        %v990 = vld [vmem:[%s9 + $0x10] sm:$0xff]
        %v991 = vld [vmem:[%s9 + $0x18] sm:$0xff]
        %v993 = vsel %vm495, %v983, 0
        %995 = vmatprep.subr.mxu0 0.0
        %996 = vmatpush1.msra.mxu0 0.0
        %997 = vmatprep.subr.mxu0 0.0
        %998 = vmatpush1.msra.mxu0 0.0
        %999 = vmatprep.subr.mxu0 0.0
        %1000 = vmatpush1.msra.mxu0 0.0
        %1001 = vmatprep.subr.mxu0 0.0
        %1002 = vmatpush1.msra.mxu0 0.0
        %1003 = vmatprep.subr.mxu0 0.0
        %1004 = vmatpush1.msra.mxu0 0.0
        %1005 = vmatprep.subr.mxu0 0.0
        %1006 = vmatpush1.msra.mxu0 0.0
        %1007 = vmatprep.subr.mxu0 0.0
        %1008 = vmatpush1.msra.mxu0 0.0
        %1009 = vmatprep.subr.mxu0 0.0
        %1010 = vmatpush1.msra.mxu0 0.0
        %1011 = vmatprep.subr.mxu0 0.0
        %1012 = vmatpush1.msra.mxu0 0.0
        %1013 = vmatprep.subr.mxu0 0.0
        %1014 = vmatpush1.msra.mxu0 0.0
        %1015 = vmatprep.subr.mxu0 0.0
        %1016 = vmatpush1.msra.mxu0 0.0
        %1017 = vmatprep.subr.mxu0 0.0
        %1018 = vmatpush1.msra.mxu0 0.0
        %1019 = vmatprep.subr.mxu0 0.0
        %1020 = vmatpush1.msra.mxu0 %v991
        %1021 = vmatprep.subr.mxu0 0.0
        %1022 = vmatpush1.msra.mxu0 %v990
        %1023 = vmatprep.subr.mxu0 0.0
        %1024 = vmatpush1.msra.mxu0 %v989
        %1025 = vmatprep.subr.mxu0 0.0
        %1026 = vmatpush1.msra.mxu0 %v988
        %1027 = vmatprep.subr.mxu0 0.0
        %1028 = vmatpush2.msra.mxu0 0.0
        %1029 = vmatprep.subr.mxu0 0.0
        %1030 = vmatpush2.msra.mxu0 0.0
        %1031 = vmatprep.subr.mxu0 0.0
        %1032 = vmatpush2.msra.mxu0 0.0
        %1033 = vmatprep.subr.mxu0 0.0
        %1034 = vmatpush2.msra.mxu0 0.0
        %1035 = vmatprep.subr.mxu0 0.0
        %1036 = vmatpush2.msra.mxu0 0.0
        %1037 = vmatprep.subr.mxu0 0.0
        %1038 = vmatpush2.msra.mxu0 0.0
        %1039 = vmatprep.subr.mxu0 0.0
        %1040 = vmatpush2.msra.mxu0 0.0
        %1041 = vmatprep.subr.mxu0 0.0
        %1042 = vmatpush2.msra.mxu0 0.0
        %1043 = vmatprep.subr.mxu0 0.0
        %1044 = vmatpush2.msra.mxu0 0.0
        %1045 = vmatprep.subr.mxu0 0.0
        %1046 = vmatpush2.msra.mxu0 0.0
        %1047 = vmatprep.subr.mxu0 0.0
        %1048 = vmatpush2.msra.mxu0 0.0
        %1049 = vmatprep.subr.mxu0 0.0
        %1050 = vmatpush2.msra.mxu0 0.0
        %1051 = vmatprep.subr.mxu0 0.0
        %1052 = vmatpush2.msra.mxu0 0.0
        %1053 = vmatprep.subr.mxu0 0.0
        %1054 = vmatpush2.msra.mxu0 0.0
        %1055 = vmatprep.subr.mxu0 0.0
        %1056 = vmatpush2.msra.mxu0 0.0
        %1057 = vmatprep.subr.mxu0 0.0
        %1058 = vmatpush2.msra.mxu0 0.0
        %1059 = vmatprep.mubr.f32.mxu0 0.0
        %1060 = vmatmul.mubr.f32.gmra.mxu0 %v993
        %v1061 = vpop.f32.mrf.mxu0
        %v1062 = vadd.f32 0.0, %v1061
        %v1063 = vpop.f32.mrf.mxu0
        %1064 = vdwg.mxu0
        %v1066 = vsel %vm495, %v811, 0
        %1068 = vmatprep.subr.mxu0 0.0
        %1069 = vmatpush1.msra.mxu0 0.0
        %1070 = vmatprep.subr.mxu0 0.0
        %1071 = vmatpush1.msra.mxu0 0.0
        %1072 = vmatprep.subr.mxu0 0.0
        %1073 = vmatpush1.msra.mxu0 0.0
        %1074 = vmatprep.subr.mxu0 0.0
        %1075 = vmatpush1.msra.mxu0 0.0
        %1076 = vmatprep.subr.mxu0 0.0
        %1077 = vmatpush1.msra.mxu0 0.0
        %1078 = vmatprep.subr.mxu0 0.0
        %1079 = vmatpush1.msra.mxu0 0.0
        %1080 = vmatprep.subr.mxu0 0.0
        %1081 = vmatpush1.msra.mxu0 0.0
        %1082 = vmatprep.subr.mxu0 0.0
        %1083 = vmatpush1.msra.mxu0 0.0
        %1084 = vmatprep.subr.mxu0 0.0
        %1085 = vmatpush1.msra.mxu0 0.0
        %1086 = vmatprep.subr.mxu0 0.0
        %1087 = vmatpush1.msra.mxu0 0.0
        %1088 = vmatprep.subr.mxu0 0.0
        %1089 = vmatpush1.msra.mxu0 0.0
        %1090 = vmatprep.subr.mxu0 0.0
        %1091 = vmatpush1.msra.mxu0 0.0
        %1092 = vmatprep.subr.mxu0 0.0
        %1093 = vmatpush1.msra.mxu0 %v987
        %1094 = vmatprep.subr.mxu0 0.0
        %1095 = vmatpush1.msra.mxu0 %v986
        %1096 = vmatprep.subr.mxu0 0.0
        %1097 = vmatpush1.msra.mxu0 %v985
        %1098 = vmatprep.subr.mxu0 0.0
        %1099 = vmatpush1.msra.mxu0 %v984
        %1100 = vmatprep.subr.mxu0 0.0
        %1101 = vmatpush2.msra.mxu0 0.0
        %1102 = vmatprep.subr.mxu0 0.0
        %1103 = vmatpush2.msra.mxu0 0.0
        %1104 = vmatprep.subr.mxu0 0.0
        %1105 = vmatpush2.msra.mxu0 0.0
        %1106 = vmatprep.subr.mxu0 0.0
        %1107 = vmatpush2.msra.mxu0 0.0
        %1108 = vmatprep.subr.mxu0 0.0
        %1109 = vmatpush2.msra.mxu0 0.0
        %1110 = vmatprep.subr.mxu0 0.0
        %1111 = vmatpush2.msra.mxu0 0.0
        %1112 = vmatprep.subr.mxu0 0.0
        %1113 = vmatpush2.msra.mxu0 0.0
        %1114 = vmatprep.subr.mxu0 0.0
        %1115 = vmatpush2.msra.mxu0 0.0
        %1116 = vmatprep.subr.mxu0 0.0
        %1117 = vmatpush2.msra.mxu0 0.0
        %1118 = vmatprep.subr.mxu0 0.0
        %1119 = vmatpush2.msra.mxu0 0.0
        %1120 = vmatprep.subr.mxu0 0.0
        %1121 = vmatpush2.msra.mxu0 0.0
        %1122 = vmatprep.subr.mxu0 0.0
        %1123 = vmatpush2.msra.mxu0 0.0
        %1124 = vmatprep.subr.mxu0 0.0
        %1125 = vmatpush2.msra.mxu0 0.0
        %1126 = vmatprep.subr.mxu0 0.0
        %1127 = vmatpush2.msra.mxu0 0.0
        %1128 = vmatprep.subr.mxu0 0.0
        %1129 = vmatpush2.msra.mxu0 0.0
        %1130 = vmatprep.subr.mxu0 0.0
        %1131 = vmatpush2.msra.mxu0 0.0
        %1132 = vmatprep.mubr.f32.mxu0 0.0
        %1133 = vmatmul.mubr.f32.gmra.mxu0 %v1066
        %v1134 = vpop.f32.mrf.mxu0
        %v1135 = vadd.f32 %v1062, %v1134
        %v1136 = vpop.f32.mrf.mxu0
        %1137 = vdwg.mxu0
        %v1138 = vld [vmem:[%s10] sm:$0x1]
        %v1140 = vlaneseq
        %v1141 = vshrl.u32 %v1140, 7
        %v1142 = vsub.s32 0, %v1141
        %v1143 = vrot.slane %v1138, %v1142
        %v1145 = vadd.f32 %v1135, %v1143
        %1146 = vst.msk [vmem:[%s11] sm:$0xff] %vm393, %v1145
      $region72: #{icarnn_forward.1} parent=63 // pred_fallthru
        _
      // Predicated region
      $region73: #{icarnn_forward.1} parent=63 // pred_check
        %p1147 = pneg %p271
      $region74: #{icarnn_forward.1} parent=63 // pred_check_branch
        %1149 = sbr.rel (%p1147) target = $region76
      $region75: #{icarnn_forward.1} parent=63 // pred_region
        _
      $region76: #{icarnn_forward.1} parent=63 // pred_fallthru
        _
      // Predicated region
      $region77: #{icarnn_forward.1} parent=63 // pred_check
        %p1150 = pneg %p271
      $region78: #{icarnn_forward.1} parent=63 // pred_check_branch
        %1152 = sbr.rel (%p1150) target = $region80
      $region79: #{icarnn_forward.1} parent=63 // pred_region
        _
      $region80: #{icarnn_forward.1} parent=63 // pred_fallthru
        _
    $region64: #{icarnn_forward.1} parent=5 // pred_fallthru
      _
    %p1153 = scmp.le.s32.totalorder 2, %s17
    // Predicated region
    $region81: #{icarnn_forward.1} parent=5 // pred_check
      %p1154 = pneg %p1153
    $region82: #{icarnn_forward.1} parent=5 // pred_check_branch
      %1156 = sbr.rel (%p1154) target = $region84
    $region83: #{icarnn_forward.1} parent=5 // pred_region
      %s1157 = ssub.s32 %s17, 2
    $region84: #{icarnn_forward.1} parent=5 // pred_fallthru
      _
  $region6: #{icarnn_forward.1} parent=0 // loop_footer
    %s21 = sadd.s32 1, %s17
  $region7: #{icarnn_forward.1} parent=0 // loop_footer_branch
    %16 = sbr.rel target = $region3
  $region8: #{icarnn_forward.1} parent=0 // loop_exit
    _

// kernel: icarnn_forward.1
$region0: #{icarnn_forward.1}
  #allocation0 [shape = 'u32[]', space=smem, size = 0x4, offset = 0x4, fixed_abs, tag = 'smem constant byte address 0x4 - core index']
  #allocation1 [shape = 'u32[144,128]{1,0:T(1,128)}', space=vmem, size = 0x12000, scoped, tag = 'internal scratch']
  #allocation2 [shape = 'f32[8,32]{1,0:T(8,128)}', space=vmem, size = 0x1000, scoped, tag = 'scratch operand']
  #allocation3 [shape = 'f32[4,8,32]{2,1,0:T(8,128)}', space=vmem, size = 0x4000, scoped, tag = 'scratch operand']
  %s0 = inlined_call_operand.vmem [shape: f32[16,8,4], index: 0, kind: input, shape index: {}]
  %s1 = inlined_call_operand.vmem [shape: f32[2,8,32], index: 1, kind: input, shape index: {}]
  %s2 = inlined_call_operand.vmem [shape: f32[4,32], index: 2, kind: input, shape index: {}]
  %s3 = inlined_call_operand.vmem [shape: f32[1,32], index: 3, kind: input, shape index: {}]
  %s4 = inlined_call_operand.vmem [shape: f32[32,32], index: 4, kind: input, shape index: {}]
  %s5 = inlined_call_operand.vmem [shape: f32[4,32], index: 5, kind: input, shape index: {}]
  %s6 = inlined_call_operand.vmem [shape: f32[1,32], index: 6, kind: input, shape index: {}]
  %s7 = inlined_call_operand.vmem [shape: f32[32,32], index: 7, kind: input, shape index: {}]
  %s8 = inlined_call_operand.vmem [shape: f32[32,4], index: 8, kind: input, shape index: {}]
  %s9 = inlined_call_operand.vmem [shape: f32[32,4], index: 9, kind: input, shape index: {}]
  %s10 = inlined_call_operand.vmem [shape: f32[1,4], index: 10, kind: input, shape index: {}]
  %s11 = inlined_call_operand.vmem [shape: f32[8,4], index: 11, kind: output, shape index: {}]
  %s12 = sld [smem:[#allocation0]]
  $region85: #{icarnn_forward.1} parent=0
    _
  %s14 = ssub.s32 1, %s12
  %s15 = scalar_select 0, %s14, %s12
  loop: start=0, step=1, limit=6
  $region2: #{icarnn_forward.1} parent=0 // loop_pre_header
    _
  $region3: #{icarnn_forward.1} parent=0 // loop_header
    %s17 = sphi 0, %s21
    %p18 = scmp.ge.s32.totalorder %s17, 6
    %s27 = sphi 0, %s29
    %s30 = sphi 0, %s27
    %s31 = sphi 0, %s30
    %s47 = sphi 0, %s31
    %s51 = sphi 0, %s51
    %s53 = sphi 0, %s51
    %s54 = sphi 0, %s53
    %s68 = sphi 0, %s54
    %s72 = sphi 0, %s72
    %s74 = sphi 0, %s72
    %s75 = sphi 0, %s74
    %s89 = sphi 0, %s75
    %s93 = sphi 0, %s93
    %s95 = sphi 0, %s93
    %s96 = sphi 0, %s95
    %s110 = sphi 0, %s96
    %s114 = sphi 0, %s114
    %s116 = sphi 0, %s114
    %s117 = sphi 0, %s116
    %s131 = sphi 0, %s117
    %s135 = sphi 0, %s135
    %s137 = sphi 0, %s135
    %s138 = sphi 0, %s137
    %s152 = sphi 0, %s138
    %s156 = sphi 0, %s156
    %s158 = sphi 0, %s156
    %s159 = sphi 0, %s158
    %s173 = sphi 0, %s159
    %s177 = sphi 0, %s177
    %s179 = sphi 0, %s177
    %s180 = sphi 0, %s179
    %s194 = sphi 0, %s180
    %s198 = sphi 0, %s198
    %s200 = sphi 0, %s198
    %s201 = sphi 0, %s200
    %s215 = sphi 0, %s201
    %s219 = sphi 0, %s219
    %s221 = sphi 0, %s219
    %s222 = sphi 0, %s221
    %s236 = sphi 0, %s222
    %s240 = sphi 0, %s240
    %s242 = sphi 0, %s240
    %s243 = sphi 0, %s242
    %s257 = sphi 0, %s243
    %s261 = sphi 0, %s261
    %s263 = sphi 0, %s261
    %s264 = sphi 0, %s263
    %s278 = sphi 0, %s264
  $region4: #{icarnn_forward.1} parent=0 // loop_header_branch
    %20 = sbr.rel (%p18) target = $region8
  $region5: #{icarnn_forward.1} parent=0 // loop_body
    %s22 = ssub.s32 %s17, 1
    %s23 = ssub.s32 %s17, 2
    %s24 = sadd.s32 %s17, 1
    %s25 = ssub.s32 %s17, %s24
    %p26 = scmp.eq.s32.totalorder %s25, 0
    %s28 = sadd.s32 %s27, 1
    %s29 = scalar_select %p26, %s27, %s28
    %p32 = pneg %p26
    %p33 = scmp.eq.s32.totalorder %s17, 3
    %p34 = por %p32, %p33
    %p35 = scmp.ne.s32.totalorder %s27, %s30
    %p36 = scmp.eq.s32.totalorder %s17, 0
    %p37 = por %p35, %p36
    %p38 = scmp.ne.s32.totalorder %s27, %s30
    %p39 = scmp.eq.s32.totalorder %s22, 3
    %p40 = por %p38, %p39
    %p41 = scmp.ne.s32.totalorder %s30, %s31
    %p42 = scmp.eq.s32.totalorder %s22, 0
    %p43 = por %p41, %p42
    %p44 = scmp.ne.s32.totalorder %s30, %s31
    %p45 = scmp.eq.s32.totalorder %s23, 3
    %p46 = por %p44, %p45
    %p48 = scmp.ne.s32.totalorder %s31, %s47
    %p49 = scmp.eq.s32.totalorder %s23, 0
    %p50 = por %p48, %p49
    %s52 = sadd.s32 %s51, 1
    %p55 = scmp.eq.s32.totalorder %s17, 3
    %p56 = scmp.ne.s32.totalorder %s51, %s53
    %p57 = scmp.eq.s32.totalorder %s17, 0
    %p58 = por %p56, %p57
    %p59 = scmp.ne.s32.totalorder %s51, %s53
    %p60 = scmp.eq.s32.totalorder %s22, 3
    %p61 = por %p59, %p60
    %p62 = scmp.ne.s32.totalorder %s53, %s54
    %p63 = scmp.eq.s32.totalorder %s22, 0
    %p64 = por %p62, %p63
    %p65 = scmp.ne.s32.totalorder %s53, %s54
    %p66 = scmp.eq.s32.totalorder %s23, 3
    %p67 = por %p65, %p66
    %p69 = scmp.ne.s32.totalorder %s54, %s68
    %p70 = scmp.eq.s32.totalorder %s23, 0
    %p71 = por %p69, %p70
    %s73 = sadd.s32 %s72, 1
    %p76 = scmp.eq.s32.totalorder %s17, 3
    %p77 = scmp.ne.s32.totalorder %s72, %s74
    %p78 = scmp.eq.s32.totalorder %s17, 0
    %p79 = por %p77, %p78
    %p80 = scmp.ne.s32.totalorder %s72, %s74
    %p81 = scmp.eq.s32.totalorder %s22, 3
    %p82 = por %p80, %p81
    %p83 = scmp.ne.s32.totalorder %s74, %s75
    %p84 = scmp.eq.s32.totalorder %s22, 0
    %p85 = por %p83, %p84
    %p86 = scmp.ne.s32.totalorder %s74, %s75
    %p87 = scmp.eq.s32.totalorder %s23, 3
    %p88 = por %p86, %p87
    %p90 = scmp.ne.s32.totalorder %s75, %s89
    %p91 = scmp.eq.s32.totalorder %s23, 0
    %p92 = por %p90, %p91
    %s94 = sadd.s32 %s93, 1
    %p97 = scmp.eq.s32.totalorder %s17, 3
    %p98 = scmp.ne.s32.totalorder %s93, %s95
    %p99 = scmp.eq.s32.totalorder %s17, 0
    %p100 = por %p98, %p99
    %p101 = scmp.ne.s32.totalorder %s93, %s95
    %p102 = scmp.eq.s32.totalorder %s22, 3
    %p103 = por %p101, %p102
    %p104 = scmp.ne.s32.totalorder %s95, %s96
    %p105 = scmp.eq.s32.totalorder %s22, 0
    %p106 = por %p104, %p105
    %p107 = scmp.ne.s32.totalorder %s95, %s96
    %p108 = scmp.eq.s32.totalorder %s23, 3
    %p109 = por %p107, %p108
    %p111 = scmp.ne.s32.totalorder %s96, %s110
    %p112 = scmp.eq.s32.totalorder %s23, 0
    %p113 = por %p111, %p112
    %s115 = sadd.s32 %s114, 1
    %p118 = scmp.eq.s32.totalorder %s17, 3
    %p119 = scmp.ne.s32.totalorder %s114, %s116
    %p120 = scmp.eq.s32.totalorder %s17, 0
    %p121 = por %p119, %p120
    %p122 = scmp.ne.s32.totalorder %s114, %s116
    %p123 = scmp.eq.s32.totalorder %s22, 3
    %p124 = por %p122, %p123
    %p125 = scmp.ne.s32.totalorder %s116, %s117
    %p126 = scmp.eq.s32.totalorder %s22, 0
    %p127 = por %p125, %p126
    %p128 = scmp.ne.s32.totalorder %s116, %s117
    %p129 = scmp.eq.s32.totalorder %s23, 3
    %p130 = por %p128, %p129
    %p132 = scmp.ne.s32.totalorder %s117, %s131
    %p133 = scmp.eq.s32.totalorder %s23, 0
    %p134 = por %p132, %p133
    %s136 = sadd.s32 %s135, 1
    %p139 = scmp.eq.s32.totalorder %s17, 3
    %p140 = scmp.ne.s32.totalorder %s135, %s137
    %p141 = scmp.eq.s32.totalorder %s17, 0
    %p142 = por %p140, %p141
    %p143 = scmp.ne.s32.totalorder %s135, %s137
    %p144 = scmp.eq.s32.totalorder %s22, 3
    %p145 = por %p143, %p144
    %p146 = scmp.ne.s32.totalorder %s137, %s138
    %p147 = scmp.eq.s32.totalorder %s22, 0
    %p148 = por %p146, %p147
    %p149 = scmp.ne.s32.totalorder %s137, %s138
    %p150 = scmp.eq.s32.totalorder %s23, 3
    %p151 = por %p149, %p150
    %p153 = scmp.ne.s32.totalorder %s138, %s152
    %p154 = scmp.eq.s32.totalorder %s23, 0
    %p155 = por %p153, %p154
    %s157 = sadd.s32 %s156, 1
    %p160 = scmp.eq.s32.totalorder %s17, 3
    %p161 = scmp.ne.s32.totalorder %s156, %s158
    %p162 = scmp.eq.s32.totalorder %s17, 0
    %p163 = por %p161, %p162
    %p164 = scmp.ne.s32.totalorder %s156, %s158
    %p165 = scmp.eq.s32.totalorder %s22, 3
    %p166 = por %p164, %p165
    %p167 = scmp.ne.s32.totalorder %s158, %s159
    %p168 = scmp.eq.s32.totalorder %s22, 0
    %p169 = por %p167, %p168
    %p170 = scmp.ne.s32.totalorder %s158, %s159
    %p171 = scmp.eq.s32.totalorder %s23, 3
    %p172 = por %p170, %p171
    %p174 = scmp.ne.s32.totalorder %s159, %s173
    %p175 = scmp.eq.s32.totalorder %s23, 0
    %p176 = por %p174, %p175
    %s178 = sadd.s32 %s177, 1
    %p181 = scmp.eq.s32.totalorder %s17, 3
    %p182 = scmp.ne.s32.totalorder %s177, %s179
    %p183 = scmp.eq.s32.totalorder %s17, 0
    %p184 = por %p182, %p183
    %p185 = scmp.ne.s32.totalorder %s177, %s179
    %p186 = scmp.eq.s32.totalorder %s22, 3
    %p187 = por %p185, %p186
    %p188 = scmp.ne.s32.totalorder %s179, %s180
    %p189 = scmp.eq.s32.totalorder %s22, 0
    %p190 = por %p188, %p189
    %p191 = scmp.ne.s32.totalorder %s179, %s180
    %p192 = scmp.eq.s32.totalorder %s23, 3
    %p193 = por %p191, %p192
    %p195 = scmp.ne.s32.totalorder %s180, %s194
    %p196 = scmp.eq.s32.totalorder %s23, 0
    %p197 = por %p195, %p196
    %s199 = sadd.s32 %s198, 1
    %p202 = scmp.eq.s32.totalorder %s17, 3
    %p203 = scmp.ne.s32.totalorder %s198, %s200
    %p204 = scmp.eq.s32.totalorder %s17, 0
    %p205 = por %p203, %p204
    %p206 = scmp.ne.s32.totalorder %s198, %s200
    %p207 = scmp.eq.s32.totalorder %s22, 3
    %p208 = por %p206, %p207
    %p209 = scmp.ne.s32.totalorder %s200, %s201
    %p210 = scmp.eq.s32.totalorder %s22, 0
    %p211 = por %p209, %p210
    %p212 = scmp.ne.s32.totalorder %s200, %s201
    %p213 = scmp.eq.s32.totalorder %s23, 3
    %p214 = por %p212, %p213
    %p216 = scmp.ne.s32.totalorder %s201, %s215
    %p217 = scmp.eq.s32.totalorder %s23, 0
    %p218 = por %p216, %p217
    %s220 = sadd.s32 %s219, 1
    %p223 = scmp.eq.s32.totalorder %s17, 3
    %p224 = scmp.ne.s32.totalorder %s219, %s221
    %p225 = scmp.eq.s32.totalorder %s17, 0
    %p226 = por %p224, %p225
    %p227 = scmp.ne.s32.totalorder %s219, %s221
    %p228 = scmp.eq.s32.totalorder %s22, 3
    %p229 = por %p227, %p228
    %p230 = scmp.ne.s32.totalorder %s221, %s222
    %p231 = scmp.eq.s32.totalorder %s22, 0
    %p232 = por %p230, %p231
    %p233 = scmp.ne.s32.totalorder %s221, %s222
    %p234 = scmp.eq.s32.totalorder %s23, 3
    %p235 = por %p233, %p234
    %p237 = scmp.ne.s32.totalorder %s222, %s236
    %p238 = scmp.eq.s32.totalorder %s23, 0
    %p239 = por %p237, %p238
    %s241 = sadd.s32 %s240, 1
    %p244 = scmp.eq.s32.totalorder %s17, 3
    %p245 = scmp.ne.s32.totalorder %s240, %s242
    %p246 = scmp.eq.s32.totalorder %s17, 0
    %p247 = por %p245, %p246
    %p248 = scmp.ne.s32.totalorder %s240, %s242
    %p249 = scmp.eq.s32.totalorder %s22, 3
    %p250 = por %p248, %p249
    %p251 = scmp.ne.s32.totalorder %s242, %s243
    %p252 = scmp.eq.s32.totalorder %s22, 0
    %p253 = por %p251, %p252
    %p254 = scmp.ne.s32.totalorder %s242, %s243
    %p255 = scmp.eq.s32.totalorder %s23, 3
    %p256 = por %p254, %p255
    %p258 = scmp.ne.s32.totalorder %s243, %s257
    %p259 = scmp.eq.s32.totalorder %s23, 0
    %p260 = por %p258, %p259
    %s262 = sadd.s32 %s261, 1
    %p265 = scmp.eq.s32.totalorder %s17, 3
    %p266 = scmp.ne.s32.totalorder %s261, %s263
    %p267 = scmp.eq.s32.totalorder %s17, 0
    %p268 = por %p266, %p267
    %p269 = scmp.ne.s32.totalorder %s261, %s263
    %p270 = scmp.eq.s32.totalorder %s22, 3
    %p271 = por %p269, %p270
    %p272 = scmp.ne.s32.totalorder %s263, %s264
    %p273 = scmp.eq.s32.totalorder %s22, 0
    %p274 = por %p272, %p273
    %p275 = scmp.ne.s32.totalorder %s263, %s264
    %p276 = scmp.eq.s32.totalorder %s23, 3
    %p277 = por %p275, %p276
    %p279 = scmp.ne.s32.totalorder %s264, %s278
    %p280 = scmp.eq.s32.totalorder %s23, 0
    %p281 = por %p279, %p280
    %p282 = scmp.le.s32.totalorder 1, %s17
    %p283 = scmp.lt.s32.totalorder %s17, 5
    %p284 = pnand %p282, %p283
    %p285 = pneg %p284
    // Predicated region
    $region9: #{icarnn_forward.1} parent=5 // pred_check
      _
    $region10: #{icarnn_forward.1} parent=5 // pred_check_branch
      %287 = sbr.rel (%p284) target = $region12
    $region11: #{icarnn_forward.1} parent=5 // pred_region
      %s288 = ssub.s32 %s17, 1
      // Predicated region
      $region13: #{icarnn_forward.1} parent=11 // pred_check
        %p289 = pneg %p64
      $region14: #{icarnn_forward.1} parent=11 // pred_check_branch
        %291 = sbr.rel (%p289) target = $region16
      $region15: #{icarnn_forward.1} parent=11 // pred_region
        _
      $region16: #{icarnn_forward.1} parent=11 // pred_fallthru
        _
      // Predicated region
      $region17: #{icarnn_forward.1} parent=11 // pred_check
        %p292 = pneg %p85
      $region18: #{icarnn_forward.1} parent=11 // pred_check_branch
        %294 = sbr.rel (%p292) target = $region20
      $region19: #{icarnn_forward.1} parent=11 // pred_region
        _
      $region20: #{icarnn_forward.1} parent=11 // pred_fallthru
        _
      // Predicated region
      $region21: #{icarnn_forward.1} parent=11 // pred_check
        %p295 = pneg %p106
      $region22: #{icarnn_forward.1} parent=11 // pred_check_branch
        %297 = sbr.rel (%p295) target = $region24
      $region23: #{icarnn_forward.1} parent=11 // pred_region
        _
      $region24: #{icarnn_forward.1} parent=11 // pred_fallthru
        _
      // Predicated region
      $region25: #{icarnn_forward.1} parent=11 // pred_check
        %p298 = pneg %p127
      $region26: #{icarnn_forward.1} parent=11 // pred_check_branch
        %300 = sbr.rel (%p298) target = $region28
      $region27: #{icarnn_forward.1} parent=11 // pred_region
        _
      $region28: #{icarnn_forward.1} parent=11 // pred_fallthru
        _
      // Predicated region
      $region29: #{icarnn_forward.1} parent=11 // pred_check
        %p301 = pneg %p148
      $region30: #{icarnn_forward.1} parent=11 // pred_check_branch
        %303 = sbr.rel (%p301) target = $region32
      $region31: #{icarnn_forward.1} parent=11 // pred_region
        _
      $region32: #{icarnn_forward.1} parent=11 // pred_fallthru
        _
      // Predicated region
      $region33: #{icarnn_forward.1} parent=11 // pred_check
        %p304 = pneg %p169
      $region34: #{icarnn_forward.1} parent=11 // pred_check_branch
        %306 = sbr.rel (%p304) target = $region36
      $region35: #{icarnn_forward.1} parent=11 // pred_region
        _
      $region36: #{icarnn_forward.1} parent=11 // pred_fallthru
        _
      // Predicated region
      $region37: #{icarnn_forward.1} parent=11 // pred_check
        %p307 = pneg %p190
      $region38: #{icarnn_forward.1} parent=11 // pred_check_branch
        %309 = sbr.rel (%p307) target = $region40
      $region39: #{icarnn_forward.1} parent=11 // pred_region
        _
      $region40: #{icarnn_forward.1} parent=11 // pred_fallthru
        _
      // Predicated region
      $region41: #{icarnn_forward.1} parent=11 // pred_check
        %p310 = pneg %p211
      $region42: #{icarnn_forward.1} parent=11 // pred_check_branch
        %312 = sbr.rel (%p310) target = $region44
      $region43: #{icarnn_forward.1} parent=11 // pred_region
        _
      $region44: #{icarnn_forward.1} parent=11 // pred_fallthru
        _
      // Predicated region
      $region45: #{icarnn_forward.1} parent=11 // pred_check
        %p313 = pneg %p232
      $region46: #{icarnn_forward.1} parent=11 // pred_check_branch
        %315 = sbr.rel (%p313) target = $region48
      $region47: #{icarnn_forward.1} parent=11 // pred_region
        _
      $region48: #{icarnn_forward.1} parent=11 // pred_fallthru
        _
      // Predicated region
      $region49: #{icarnn_forward.1} parent=11 // pred_check
        %p316 = pneg %p253
      $region50: #{icarnn_forward.1} parent=11 // pred_check_branch
        %318 = sbr.rel (%p316) target = $region52
      $region51: #{icarnn_forward.1} parent=11 // pred_region
        _
      $region52: #{icarnn_forward.1} parent=11 // pred_fallthru
        _
    $region12: #{icarnn_forward.1} parent=5 // pred_fallthru
      _
    %p319 = scmp.lt.s32.totalorder %s17, 4
    // Predicated region
    $region53: #{icarnn_forward.1} parent=5 // pred_check
      %p320 = pneg %p319
    $region54: #{icarnn_forward.1} parent=5 // pred_check_branch
      %322 = sbr.rel (%p320) target = $region56
    $region55: #{icarnn_forward.1} parent=5 // pred_region
      // Predicated region
      $region57: #{icarnn_forward.1} parent=55 // pred_check
        %p323 = pneg %p37
      $region58: #{icarnn_forward.1} parent=55 // pred_check_branch
        %325 = sbr.rel (%p323) target = $region60
      $region59: #{icarnn_forward.1} parent=55 // pred_region
        %s326 = smul.u32 4, %s17
        %p327 = scmp.lt.s32.totalorder %s326, 15
        %s328 = scalar_select %p327, %s326, 15
        %s329 = smul.addr %s328, 8
        %s330 = scalar_lea.vmem %s0, %s329
        %s331 = smul.u32 4, %s17
      $region60: #{icarnn_forward.1} parent=55 // pred_fallthru
        _
    $region56: #{icarnn_forward.1} parent=5 // pred_fallthru
      _
    %p332 = scmp.le.s32.totalorder 1, %s17
    %p333 = scmp.lt.s32.totalorder %s17, 5
    %p334 = pnand %p332, %p333
    %p335 = pneg %p334
    // Predicated region
    $region61: #{icarnn_forward.1} parent=5 // pred_check
      _
    $region62: #{icarnn_forward.1} parent=5 // pred_check_branch
      %337 = sbr.rel (%p334) target = $region64
    $region63: #{icarnn_forward.1} parent=5 // pred_region
      %s338 = ssub.s32 %s17, 1
      %s339 = smul.u32 4, %s22
      %p340 = scmp.lt.s32.totalorder %s339, 15
      %s341 = scalar_select %p340, %s339, 15
      %s342 = smul.addr %s341, 8
      %s343 = scalar_lea.vmem %s0, %s342
      %p344 = pneg %p43
      %p345 = pneg %p40
      %p346 = pneg %p64
      %p347 = pneg %p61
      %p348 = pneg %p85
      %p349 = pneg %p82
      %p350 = pneg %p106
      %p351 = pneg %p103
      %p352 = pneg %p127
      %p353 = pneg %p124
      %p354 = pneg %p148
      %p355 = pneg %p145
      %p356 = pneg %p169
      %p357 = pneg %p166
      %p358 = pneg %p190
      %p359 = pneg %p187
      %p360 = pneg %p211
      %p361 = pneg %p208
      %p362 = pneg %p232
      %p363 = pneg %p229
      %p364 = pneg %p253
      %p365 = pneg %p250
      %p366 = pneg %p274
      %p367 = pneg %p271
      %s368 = smul.u32 4, %s22
      %p369 = scmp.lt.s32.totalorder %s368, 15
      %s370 = scalar_select %p369, %s368, 15
      %s371 = smul.addr %s370, 8
      %s372 = scalar_lea.vmem %s0, %s371
      %s373 = smul.u32 4, %s22
      %p374 = scmp.eq.s32.totalorder %s22, 0
      // Predicated region
      $region65: #{icarnn_forward.1} parent=63 // pred_check
        %p375 = pneg %p374
      $region66: #{icarnn_forward.1} parent=63 // pred_check_branch
        %377 = sbr.rel (%p375) target = $region68
      $region67: #{icarnn_forward.1} parent=63 // pred_region
        %v378 = vld [vmem:[%s1] sm:$0xff]
        %vm379 = vcmask 261120
        %380 = vst.msk [vmem:[#allocation2] sm:$0xff] %vm379, %v378
      $region68: #{icarnn_forward.1} parent=63 // pred_fallthru
        _
      %v381 = vld [vmem:[%s372] sm:$0xff]
      %v382 = vld [vmem:[%s372 + $0x8] sm:$0xff]
      %v383 = vld [vmem:[%s372 + $0x10] sm:$0xff]
      %v384 = vld [vmem:[%s372 + $0x18] sm:$0xff]
      %v385 = vld [vmem:[%s2] sm:$0xf]
      %v386 = vld [vmem:[%s3] sm:$0x1]
      %v388 = vlaneseq
      %v389 = vshrl.u32 %v388, 7
      %v390 = vsub.s32 0, %v389
      %v391 = vrot.slane %v386, %v390
      %vm393 = vcmask 31744
      %v395 = vsel %vm393, %v381, 0
      %v398 = vsel %vm393, %v382, 0
      %v401 = vsel %vm393, %v383, 0
      %v404 = vsel %vm393, %v384, 0
      %vm406 = vcmask 1043456
      %v408 = vsel %vm406, %v385, 0
      %410 = vmatprep.subr.mxu0 0.0
      %411 = vmatpush1.msra.mxu0 0.0
      %412 = vmatprep.subr.mxu0 0.0
      %413 = vmatpush1.msra.mxu0 0.0
      %414 = vmatprep.subr.mxu0 0.0
      %415 = vmatpush1.msra.mxu0 0.0
      %416 = vmatprep.subr.mxu0 0.0
      %417 = vmatpush1.msra.mxu0 0.0
      %418 = vmatprep.subr.mxu0 0.0
      %419 = vmatpush1.msra.mxu0 0.0
      %420 = vmatprep.subr.mxu0 0.0
      %421 = vmatpush1.msra.mxu0 0.0
      %422 = vmatprep.subr.mxu0 0.0
      %423 = vmatpush1.msra.mxu0 0.0
      %424 = vmatprep.subr.mxu0 0.0
      %425 = vmatpush1.msra.mxu0 0.0
      %426 = vmatprep.subr.mxu0 0.0
      %427 = vmatpush1.msra.mxu0 0.0
      %428 = vmatprep.subr.mxu0 0.0
      %429 = vmatpush1.msra.mxu0 0.0
      %430 = vmatprep.subr.mxu0 0.0
      %431 = vmatpush1.msra.mxu0 0.0
      %432 = vmatprep.subr.mxu0 0.0
      %433 = vmatpush1.msra.mxu0 0.0
      %434 = vmatprep.subr.mxu0 0.0
      %435 = vmatpush1.msra.mxu0 0.0
      %436 = vmatprep.subr.mxu0 0.0
      %437 = vmatpush1.msra.mxu0 0.0
      %438 = vmatprep.subr.mxu0 0.0
      %439 = vmatpush1.msra.mxu0 0.0
      %440 = vmatprep.subr.mxu0 0.0
      %441 = vmatpush1.msra.mxu0 %v408
      %442 = vmatprep.subr.mxu0 0.0
      %443 = vmatpush2.msra.mxu0 0.0
      %444 = vmatprep.subr.mxu0 0.0
      %445 = vmatpush2.msra.mxu0 0.0
      %446 = vmatprep.subr.mxu0 0.0
      %447 = vmatpush2.msra.mxu0 0.0
      %448 = vmatprep.subr.mxu0 0.0
      %449 = vmatpush2.msra.mxu0 0.0
      %450 = vmatprep.subr.mxu0 0.0
      %451 = vmatpush2.msra.mxu0 0.0
      %452 = vmatprep.subr.mxu0 0.0
      %453 = vmatpush2.msra.mxu0 0.0
      %454 = vmatprep.subr.mxu0 0.0
      %455 = vmatpush2.msra.mxu0 0.0
      %456 = vmatprep.subr.mxu0 0.0
      %457 = vmatpush2.msra.mxu0 0.0
      %458 = vmatprep.subr.mxu0 0.0
      %459 = vmatpush2.msra.mxu0 0.0
      %460 = vmatprep.subr.mxu0 0.0
      %461 = vmatpush2.msra.mxu0 0.0
      %462 = vmatprep.subr.mxu0 0.0
      %463 = vmatpush2.msra.mxu0 0.0
      %464 = vmatprep.subr.mxu0 0.0
      %465 = vmatpush2.msra.mxu0 0.0
      %466 = vmatprep.subr.mxu0 0.0
      %467 = vmatpush2.msra.mxu0 0.0
      %468 = vmatprep.subr.mxu0 0.0
      %469 = vmatpush2.msra.mxu0 0.0
      %470 = vmatprep.subr.mxu0 0.0
      %471 = vmatpush2.msra.mxu0 0.0
      %472 = vmatprep.subr.mxu0 0.0
      %473 = vmatpush2.msra.mxu0 0.0
      %474 = vmatprep.mubr.f32.mxu0 0.0
      %475 = vmatmul.mubr.f32.gmra.mxu0 %v395
      %v476 = vpop.f32.mrf.mxu0
      %v477 = vadd.f32 %v391, %v476
      %v478 = vpop.f32.mrf.mxu0
      %479 = vmatprep.mubr.f32.mxu0 0.0
      %480 = vmatmul.mubr.f32.gmra.mxu0 %v398
      %v481 = vpop.f32.mrf.mxu0
      %v482 = vadd.f32 %v391, %v481
      %v483 = vpop.f32.mrf.mxu0
      %484 = vmatprep.mubr.f32.mxu0 0.0
      %485 = vmatmul.mubr.f32.gmra.mxu0 %v401
      %v486 = vpop.f32.mrf.mxu0
      %v487 = vadd.f32 %v391, %v486
      %v488 = vpop.f32.mrf.mxu0
      %489 = vmatprep.mubr.f32.mxu0 0.0
      %490 = vmatmul.mubr.f32.gmra.mxu0 %v404
      %v491 = vpop.f32.mrf.mxu0
      %v492 = vadd.f32 %v391, %v491
      %v493 = vpop.f32.mrf.mxu0
      %494 = vdwg.mxu0
      %vm495 = vcmask 261120
      %496 = vst.msk [vmem:[#allocation3] sm:$0xff] %vm495, %v477
      %497 = vst.msk [vmem:[#allocation3 + $0x8] sm:$0xff] %vm495, %v482
      %498 = vst.msk [vmem:[#allocation3 + $0x10] sm:$0xff] %vm495, %v487
      %499 = vst.msk [vmem:[#allocation3 + $0x18] sm:$0xff] %vm495, %v492
      %v500 = vld [vmem:[%s4] sm:$0xff]
      %v501 = vld [vmem:[%s4 + $0x8] sm:$0xff]
      %v502 = vld [vmem:[%s4 + $0x10] sm:$0xff]
      %v503 = vld [vmem:[%s4 + $0x18] sm:$0xff]
      %v504 = vld [vmem:[#allocation2] sm:$0xff]
      %v505 = vld [vmem:[#allocation3] sm:$0xff]
      %v507 = vsel %vm495, %v504, 0
      %509 = vmatprep.subr.mxu0 0.0
      %510 = vmatpush1.msra.mxu0 0.0
      %511 = vmatprep.subr.mxu0 0.0
      %512 = vmatpush1.msra.mxu0 0.0
      %513 = vmatprep.subr.mxu0 0.0
      %514 = vmatpush1.msra.mxu0 0.0
      %515 = vmatprep.subr.mxu0 0.0
      %516 = vmatpush1.msra.mxu0 0.0
      %517 = vmatprep.subr.mxu0 0.0
      %518 = vmatpush1.msra.mxu0 0.0
      %519 = vmatprep.subr.mxu0 0.0
      %520 = vmatpush1.msra.mxu0 0.0
      %521 = vmatprep.subr.mxu0 0.0
      %522 = vmatpush1.msra.mxu0 0.0
      %523 = vmatprep.subr.mxu0 0.0
      %524 = vmatpush1.msra.mxu0 0.0
      %525 = vmatprep.subr.mxu0 0.0
      %526 = vmatpush1.msra.mxu0 0.0
      %527 = vmatprep.subr.mxu0 0.0
      %528 = vmatpush1.msra.mxu0 0.0
      %529 = vmatprep.subr.mxu0 0.0
      %530 = vmatpush1.msra.mxu0 0.0
      %531 = vmatprep.subr.mxu0 0.0
      %532 = vmatpush1.msra.mxu0 0.0
      %533 = vmatprep.subr.mxu0 0.0
      %534 = vmatpush1.msra.mxu0 %v503
      %535 = vmatprep.subr.mxu0 0.0
      %536 = vmatpush1.msra.mxu0 %v502
      %537 = vmatprep.subr.mxu0 0.0
      %538 = vmatpush1.msra.mxu0 %v501
      %539 = vmatprep.subr.mxu0 0.0
      %540 = vmatpush1.msra.mxu0 %v500
      %541 = vmatprep.subr.mxu0 0.0
      %542 = vmatpush2.msra.mxu0 0.0
      %543 = vmatprep.subr.mxu0 0.0
      %544 = vmatpush2.msra.mxu0 0.0
      %545 = vmatprep.subr.mxu0 0.0
      %546 = vmatpush2.msra.mxu0 0.0
      %547 = vmatprep.subr.mxu0 0.0
      %548 = vmatpush2.msra.mxu0 0.0
      %549 = vmatprep.subr.mxu0 0.0
      %550 = vmatpush2.msra.mxu0 0.0
      %551 = vmatprep.subr.mxu0 0.0
      %552 = vmatpush2.msra.mxu0 0.0
      %553 = vmatprep.subr.mxu0 0.0
      %554 = vmatpush2.msra.mxu0 0.0
      %555 = vmatprep.subr.mxu0 0.0
      %556 = vmatpush2.msra.mxu0 0.0
      %557 = vmatprep.subr.mxu0 0.0
      %558 = vmatpush2.msra.mxu0 0.0
      %559 = vmatprep.subr.mxu0 0.0
      %560 = vmatpush2.msra.mxu0 0.0
      %561 = vmatprep.subr.mxu0 0.0
      %562 = vmatpush2.msra.mxu0 0.0
      %563 = vmatprep.subr.mxu0 0.0
      %564 = vmatpush2.msra.mxu0 0.0
      %565 = vmatprep.subr.mxu0 0.0
      %566 = vmatpush2.msra.mxu0 0.0
      %567 = vmatprep.subr.mxu0 0.0
      %568 = vmatpush2.msra.mxu0 0.0
      %569 = vmatprep.subr.mxu0 0.0
      %570 = vmatpush2.msra.mxu0 0.0
      %571 = vmatprep.subr.mxu0 0.0
      %572 = vmatpush2.msra.mxu0 0.0
      %573 = vmatprep.mubr.f32.mxu0 0.0
      %574 = vmatmul.mubr.f32.gmra.mxu0 %v507
      %v575 = vpop.f32.mrf.mxu0
      %v576 = vadd.f32 0.0, %v575
      %v577 = vpop.f32.mrf.mxu0
      %578 = vdwg.mxu0
      %v579 = vadd.f32 %v505, %v576
      %v580 = vtanh.pop %v579
      %s581 = scalar_lea.vmem [#allocation3], 8
      %v582 = vld [vmem:[%s581] sm:$0xff]
      %v584 = vsel %vm495, %v580, 0
      %586 = vmatprep.subr.mxu0 0.0
      %587 = vmatpush1.msra.mxu0 0.0
      %588 = vmatprep.subr.mxu0 0.0
      %589 = vmatpush1.msra.mxu0 0.0
      %590 = vmatprep.subr.mxu0 0.0
      %591 = vmatpush1.msra.mxu0 0.0
      %592 = vmatprep.subr.mxu0 0.0
      %593 = vmatpush1.msra.mxu0 0.0
      %594 = vmatprep.subr.mxu0 0.0
      %595 = vmatpush1.msra.mxu0 0.0
      %596 = vmatprep.subr.mxu0 0.0
      %597 = vmatpush1.msra.mxu0 0.0
      %598 = vmatprep.subr.mxu0 0.0
      %599 = vmatpush1.msra.mxu0 0.0
      %600 = vmatprep.subr.mxu0 0.0
      %601 = vmatpush1.msra.mxu0 0.0
      %602 = vmatprep.subr.mxu0 0.0
      %603 = vmatpush1.msra.mxu0 0.0
      %604 = vmatprep.subr.mxu0 0.0
      %605 = vmatpush1.msra.mxu0 0.0
      %606 = vmatprep.subr.mxu0 0.0
      %607 = vmatpush1.msra.mxu0 0.0
      %608 = vmatprep.subr.mxu0 0.0
      %609 = vmatpush1.msra.mxu0 0.0
      %610 = vmatprep.subr.mxu0 0.0
      %611 = vmatpush1.msra.mxu0 %v503
      %612 = vmatprep.subr.mxu0 0.0
      %613 = vmatpush1.msra.mxu0 %v502
      %614 = vmatprep.subr.mxu0 0.0
      %615 = vmatpush1.msra.mxu0 %v501
      %616 = vmatprep.subr.mxu0 0.0
      %617 = vmatpush1.msra.mxu0 %v500
      %618 = vmatprep.subr.mxu0 0.0
      %619 = vmatpush2.msra.mxu0 0.0
      %620 = vmatprep.subr.mxu0 0.0
      %621 = vmatpush2.msra.mxu0 0.0
      %622 = vmatprep.subr.mxu0 0.0
      %623 = vmatpush2.msra.mxu0 0.0
      %624 = vmatprep.subr.mxu0 0.0
      %625 = vmatpush2.msra.mxu0 0.0
      %626 = vmatprep.subr.mxu0 0.0
      %627 = vmatpush2.msra.mxu0 0.0
      %628 = vmatprep.subr.mxu0 0.0
      %629 = vmatpush2.msra.mxu0 0.0
      %630 = vmatprep.subr.mxu0 0.0
      %631 = vmatpush2.msra.mxu0 0.0
      %632 = vmatprep.subr.mxu0 0.0
      %633 = vmatpush2.msra.mxu0 0.0
      %634 = vmatprep.subr.mxu0 0.0
      %635 = vmatpush2.msra.mxu0 0.0
      %636 = vmatprep.subr.mxu0 0.0
      %637 = vmatpush2.msra.mxu0 0.0
      %638 = vmatprep.subr.mxu0 0.0
      %639 = vmatpush2.msra.mxu0 0.0
      %640 = vmatprep.subr.mxu0 0.0
      %641 = vmatpush2.msra.mxu0 0.0
      %642 = vmatprep.subr.mxu0 0.0
      %643 = vmatpush2.msra.mxu0 0.0
      %644 = vmatprep.subr.mxu0 0.0
      %645 = vmatpush2.msra.mxu0 0.0
      %646 = vmatprep.subr.mxu0 0.0
      %647 = vmatpush2.msra.mxu0 0.0
      %648 = vmatprep.subr.mxu0 0.0
      %649 = vmatpush2.msra.mxu0 0.0
      %650 = vmatprep.mubr.f32.mxu0 0.0
      %651 = vmatmul.mubr.f32.gmra.mxu0 %v584
      %v652 = vpop.f32.mrf.mxu0
      %v653 = vadd.f32 0.0, %v652
      %v654 = vpop.f32.mrf.mxu0
      %655 = vdwg.mxu0
      %v656 = vadd.f32 %v582, %v653
      %v657 = vtanh.pop %v656
      %s658 = scalar_lea.vmem [#allocation3], 16
      %v659 = vld [vmem:[%s658] sm:$0xff]
      %v661 = vsel %vm495, %v657, 0
      %663 = vmatprep.subr.mxu0 0.0
      %664 = vmatpush1.msra.mxu0 0.0
      %665 = vmatprep.subr.mxu0 0.0
      %666 = vmatpush1.msra.mxu0 0.0
      %667 = vmatprep.subr.mxu0 0.0
      %668 = vmatpush1.msra.mxu0 0.0
      %669 = vmatprep.subr.mxu0 0.0
      %670 = vmatpush1.msra.mxu0 0.0
      %671 = vmatprep.subr.mxu0 0.0
      %672 = vmatpush1.msra.mxu0 0.0
      %673 = vmatprep.subr.mxu0 0.0
      %674 = vmatpush1.msra.mxu0 0.0
      %675 = vmatprep.subr.mxu0 0.0
      %676 = vmatpush1.msra.mxu0 0.0
      %677 = vmatprep.subr.mxu0 0.0
      %678 = vmatpush1.msra.mxu0 0.0
      %679 = vmatprep.subr.mxu0 0.0
      %680 = vmatpush1.msra.mxu0 0.0
      %681 = vmatprep.subr.mxu0 0.0
      %682 = vmatpush1.msra.mxu0 0.0
      %683 = vmatprep.subr.mxu0 0.0
      %684 = vmatpush1.msra.mxu0 0.0
      %685 = vmatprep.subr.mxu0 0.0
      %686 = vmatpush1.msra.mxu0 0.0
      %687 = vmatprep.subr.mxu0 0.0
      %688 = vmatpush1.msra.mxu0 %v503
      %689 = vmatprep.subr.mxu0 0.0
      %690 = vmatpush1.msra.mxu0 %v502
      %691 = vmatprep.subr.mxu0 0.0
      %692 = vmatpush1.msra.mxu0 %v501
      %693 = vmatprep.subr.mxu0 0.0
      %694 = vmatpush1.msra.mxu0 %v500
      %695 = vmatprep.subr.mxu0 0.0
      %696 = vmatpush2.msra.mxu0 0.0
      %697 = vmatprep.subr.mxu0 0.0
      %698 = vmatpush2.msra.mxu0 0.0
      %699 = vmatprep.subr.mxu0 0.0
      %700 = vmatpush2.msra.mxu0 0.0
      %701 = vmatprep.subr.mxu0 0.0
      %702 = vmatpush2.msra.mxu0 0.0
      %703 = vmatprep.subr.mxu0 0.0
      %704 = vmatpush2.msra.mxu0 0.0
      %705 = vmatprep.subr.mxu0 0.0
      %706 = vmatpush2.msra.mxu0 0.0
      %707 = vmatprep.subr.mxu0 0.0
      %708 = vmatpush2.msra.mxu0 0.0
      %709 = vmatprep.subr.mxu0 0.0
      %710 = vmatpush2.msra.mxu0 0.0
      %711 = vmatprep.subr.mxu0 0.0
      %712 = vmatpush2.msra.mxu0 0.0
      %713 = vmatprep.subr.mxu0 0.0
      %714 = vmatpush2.msra.mxu0 0.0
      %715 = vmatprep.subr.mxu0 0.0
      %716 = vmatpush2.msra.mxu0 0.0
      %717 = vmatprep.subr.mxu0 0.0
      %718 = vmatpush2.msra.mxu0 0.0
      %719 = vmatprep.subr.mxu0 0.0
      %720 = vmatpush2.msra.mxu0 0.0
      %721 = vmatprep.subr.mxu0 0.0
      %722 = vmatpush2.msra.mxu0 0.0
      %723 = vmatprep.subr.mxu0 0.0
      %724 = vmatpush2.msra.mxu0 0.0
      %725 = vmatprep.subr.mxu0 0.0
      %726 = vmatpush2.msra.mxu0 0.0
      %727 = vmatprep.mubr.f32.mxu0 0.0
      %728 = vmatmul.mubr.f32.gmra.mxu0 %v661
      %v729 = vpop.f32.mrf.mxu0
      %v730 = vadd.f32 0.0, %v729
      %v731 = vpop.f32.mrf.mxu0
      %732 = vdwg.mxu0
      %v733 = vadd.f32 %v659, %v730
      %v734 = vtanh.pop %v733
      %s735 = scalar_lea.vmem [#allocation3], 24
      %v736 = vld [vmem:[%s735] sm:$0xff]
      %v738 = vsel %vm495, %v734, 0
      %740 = vmatprep.subr.mxu0 0.0
      %741 = vmatpush1.msra.mxu0 0.0
      %742 = vmatprep.subr.mxu0 0.0
      %743 = vmatpush1.msra.mxu0 0.0
      %744 = vmatprep.subr.mxu0 0.0
      %745 = vmatpush1.msra.mxu0 0.0
      %746 = vmatprep.subr.mxu0 0.0
      %747 = vmatpush1.msra.mxu0 0.0
      %748 = vmatprep.subr.mxu0 0.0
      %749 = vmatpush1.msra.mxu0 0.0
      %750 = vmatprep.subr.mxu0 0.0
      %751 = vmatpush1.msra.mxu0 0.0
      %752 = vmatprep.subr.mxu0 0.0
      %753 = vmatpush1.msra.mxu0 0.0
      %754 = vmatprep.subr.mxu0 0.0
      %755 = vmatpush1.msra.mxu0 0.0
      %756 = vmatprep.subr.mxu0 0.0
      %757 = vmatpush1.msra.mxu0 0.0
      %758 = vmatprep.subr.mxu0 0.0
      %759 = vmatpush1.msra.mxu0 0.0
      %760 = vmatprep.subr.mxu0 0.0
      %761 = vmatpush1.msra.mxu0 0.0
      %762 = vmatprep.subr.mxu0 0.0
      %763 = vmatpush1.msra.mxu0 0.0
      %764 = vmatprep.subr.mxu0 0.0
      %765 = vmatpush1.msra.mxu0 %v503
      %766 = vmatprep.subr.mxu0 0.0
      %767 = vmatpush1.msra.mxu0 %v502
      %768 = vmatprep.subr.mxu0 0.0
      %769 = vmatpush1.msra.mxu0 %v501
      %770 = vmatprep.subr.mxu0 0.0
      %771 = vmatpush1.msra.mxu0 %v500
      %772 = vmatprep.subr.mxu0 0.0
      %773 = vmatpush2.msra.mxu0 0.0
      %774 = vmatprep.subr.mxu0 0.0
      %775 = vmatpush2.msra.mxu0 0.0
      %776 = vmatprep.subr.mxu0 0.0
      %777 = vmatpush2.msra.mxu0 0.0
      %778 = vmatprep.subr.mxu0 0.0
      %779 = vmatpush2.msra.mxu0 0.0
      %780 = vmatprep.subr.mxu0 0.0
      %781 = vmatpush2.msra.mxu0 0.0
      %782 = vmatprep.subr.mxu0 0.0
      %783 = vmatpush2.msra.mxu0 0.0
      %784 = vmatprep.subr.mxu0 0.0
      %785 = vmatpush2.msra.mxu0 0.0
      %786 = vmatprep.subr.mxu0 0.0
      %787 = vmatpush2.msra.mxu0 0.0
      %788 = vmatprep.subr.mxu0 0.0
      %789 = vmatpush2.msra.mxu0 0.0
      %790 = vmatprep.subr.mxu0 0.0
      %791 = vmatpush2.msra.mxu0 0.0
      %792 = vmatprep.subr.mxu0 0.0
      %793 = vmatpush2.msra.mxu0 0.0
      %794 = vmatprep.subr.mxu0 0.0
      %795 = vmatpush2.msra.mxu0 0.0
      %796 = vmatprep.subr.mxu0 0.0
      %797 = vmatpush2.msra.mxu0 0.0
      %798 = vmatprep.subr.mxu0 0.0
      %799 = vmatpush2.msra.mxu0 0.0
      %800 = vmatprep.subr.mxu0 0.0
      %801 = vmatpush2.msra.mxu0 0.0
      %802 = vmatprep.subr.mxu0 0.0
      %803 = vmatpush2.msra.mxu0 0.0
      %804 = vmatprep.mubr.f32.mxu0 0.0
      %805 = vmatmul.mubr.f32.gmra.mxu0 %v738
      %v806 = vpop.f32.mrf.mxu0
      %v807 = vadd.f32 0.0, %v806
      %v808 = vpop.f32.mrf.mxu0
      %809 = vdwg.mxu0
      %v810 = vadd.f32 %v736, %v807
      %v811 = vtanh.pop %v810
      %812 = vst.msk [vmem:[#allocation2] sm:$0xff] %vm495, %v811
      %p813 = scmp.eq.s32.totalorder %s22, 3
      // Predicated region
      $region69: #{icarnn_forward.1} parent=63 // pred_check
        %p814 = pneg %p813
      $region70: #{icarnn_forward.1} parent=63 // pred_check_branch
        %816 = sbr.rel (%p814) target = $region72
      $region71: #{icarnn_forward.1} parent=63 // pred_region
        %s817 = scalar_lea.vmem %s372, 24
        %v818 = vld [vmem:[%s817] sm:$0xff]
        %v819 = vld [vmem:[%s5] sm:$0xf]
        %v820 = vld [vmem:[%s6] sm:$0x1]
        %v822 = vlaneseq
        %v823 = vshrl.u32 %v822, 7
        %v824 = vsub.s32 0, %v823
        %v825 = vrot.slane %v820, %v824
        %v828 = vsel %vm393, %v818, 0
        %v831 = vsel %vm406, %v819, 0
        %833 = vmatprep.subr.mxu0 0.0
        %834 = vmatpush1.msra.mxu0 0.0
        %835 = vmatprep.subr.mxu0 0.0
        %836 = vmatpush1.msra.mxu0 0.0
        %837 = vmatprep.subr.mxu0 0.0
        %838 = vmatpush1.msra.mxu0 0.0
        %839 = vmatprep.subr.mxu0 0.0
        %840 = vmatpush1.msra.mxu0 0.0
        %841 = vmatprep.subr.mxu0 0.0
        %842 = vmatpush1.msra.mxu0 0.0
        %843 = vmatprep.subr.mxu0 0.0
        %844 = vmatpush1.msra.mxu0 0.0
        %845 = vmatprep.subr.mxu0 0.0
        %846 = vmatpush1.msra.mxu0 0.0
        %847 = vmatprep.subr.mxu0 0.0
        %848 = vmatpush1.msra.mxu0 0.0
        %849 = vmatprep.subr.mxu0 0.0
        %850 = vmatpush1.msra.mxu0 0.0
        %851 = vmatprep.subr.mxu0 0.0
        %852 = vmatpush1.msra.mxu0 0.0
        %853 = vmatprep.subr.mxu0 0.0
        %854 = vmatpush1.msra.mxu0 0.0
        %855 = vmatprep.subr.mxu0 0.0
        %856 = vmatpush1.msra.mxu0 0.0
        %857 = vmatprep.subr.mxu0 0.0
        %858 = vmatpush1.msra.mxu0 0.0
        %859 = vmatprep.subr.mxu0 0.0
        %860 = vmatpush1.msra.mxu0 0.0
        %861 = vmatprep.subr.mxu0 0.0
        %862 = vmatpush1.msra.mxu0 0.0
        %863 = vmatprep.subr.mxu0 0.0
        %864 = vmatpush1.msra.mxu0 %v831
        %865 = vmatprep.subr.mxu0 0.0
        %866 = vmatpush2.msra.mxu0 0.0
        %867 = vmatprep.subr.mxu0 0.0
        %868 = vmatpush2.msra.mxu0 0.0
        %869 = vmatprep.subr.mxu0 0.0
        %870 = vmatpush2.msra.mxu0 0.0
        %871 = vmatprep.subr.mxu0 0.0
        %872 = vmatpush2.msra.mxu0 0.0
        %873 = vmatprep.subr.mxu0 0.0
        %874 = vmatpush2.msra.mxu0 0.0
        %875 = vmatprep.subr.mxu0 0.0
        %876 = vmatpush2.msra.mxu0 0.0
        %877 = vmatprep.subr.mxu0 0.0
        %878 = vmatpush2.msra.mxu0 0.0
        %879 = vmatprep.subr.mxu0 0.0
        %880 = vmatpush2.msra.mxu0 0.0
        %881 = vmatprep.subr.mxu0 0.0
        %882 = vmatpush2.msra.mxu0 0.0
        %883 = vmatprep.subr.mxu0 0.0
        %884 = vmatpush2.msra.mxu0 0.0
        %885 = vmatprep.subr.mxu0 0.0
        %886 = vmatpush2.msra.mxu0 0.0
        %887 = vmatprep.subr.mxu0 0.0
        %888 = vmatpush2.msra.mxu0 0.0
        %889 = vmatprep.subr.mxu0 0.0
        %890 = vmatpush2.msra.mxu0 0.0
        %891 = vmatprep.subr.mxu0 0.0
        %892 = vmatpush2.msra.mxu0 0.0
        %893 = vmatprep.subr.mxu0 0.0
        %894 = vmatpush2.msra.mxu0 0.0
        %895 = vmatprep.subr.mxu0 0.0
        %896 = vmatpush2.msra.mxu0 0.0
        %897 = vmatprep.mubr.f32.mxu0 0.0
        %898 = vmatmul.mubr.f32.gmra.mxu0 %v828
        %v899 = vpop.f32.mrf.mxu0
        %v900 = vadd.f32 %v825, %v899
        %v901 = vpop.f32.mrf.mxu0
        %902 = vdwg.mxu0
        %s903 = scalar_lea.vmem %s1, 8
        %v904 = vld [vmem:[%s903] sm:$0xff]
        %v905 = vld [vmem:[%s7] sm:$0xff]
        %v906 = vld [vmem:[%s7 + $0x8] sm:$0xff]
        %v907 = vld [vmem:[%s7 + $0x10] sm:$0xff]
        %v908 = vld [vmem:[%s7 + $0x18] sm:$0xff]
        %v910 = vsel %vm495, %v904, 0
        %912 = vmatprep.subr.mxu0 0.0
        %913 = vmatpush1.msra.mxu0 0.0
        %914 = vmatprep.subr.mxu0 0.0
        %915 = vmatpush1.msra.mxu0 0.0
        %916 = vmatprep.subr.mxu0 0.0
        %917 = vmatpush1.msra.mxu0 0.0
        %918 = vmatprep.subr.mxu0 0.0
        %919 = vmatpush1.msra.mxu0 0.0
        %920 = vmatprep.subr.mxu0 0.0
        %921 = vmatpush1.msra.mxu0 0.0
        %922 = vmatprep.subr.mxu0 0.0
        %923 = vmatpush1.msra.mxu0 0.0
        %924 = vmatprep.subr.mxu0 0.0
        %925 = vmatpush1.msra.mxu0 0.0
        %926 = vmatprep.subr.mxu0 0.0
        %927 = vmatpush1.msra.mxu0 0.0
        %928 = vmatprep.subr.mxu0 0.0
        %929 = vmatpush1.msra.mxu0 0.0
        %930 = vmatprep.subr.mxu0 0.0
        %931 = vmatpush1.msra.mxu0 0.0
        %932 = vmatprep.subr.mxu0 0.0
        %933 = vmatpush1.msra.mxu0 0.0
        %934 = vmatprep.subr.mxu0 0.0
        %935 = vmatpush1.msra.mxu0 0.0
        %936 = vmatprep.subr.mxu0 0.0
        %937 = vmatpush1.msra.mxu0 %v908
        %938 = vmatprep.subr.mxu0 0.0
        %939 = vmatpush1.msra.mxu0 %v907
        %940 = vmatprep.subr.mxu0 0.0
        %941 = vmatpush1.msra.mxu0 %v906
        %942 = vmatprep.subr.mxu0 0.0
        %943 = vmatpush1.msra.mxu0 %v905
        %944 = vmatprep.subr.mxu0 0.0
        %945 = vmatpush2.msra.mxu0 0.0
        %946 = vmatprep.subr.mxu0 0.0
        %947 = vmatpush2.msra.mxu0 0.0
        %948 = vmatprep.subr.mxu0 0.0
        %949 = vmatpush2.msra.mxu0 0.0
        %950 = vmatprep.subr.mxu0 0.0
        %951 = vmatpush2.msra.mxu0 0.0
        %952 = vmatprep.subr.mxu0 0.0
        %953 = vmatpush2.msra.mxu0 0.0
        %954 = vmatprep.subr.mxu0 0.0
        %955 = vmatpush2.msra.mxu0 0.0
        %956 = vmatprep.subr.mxu0 0.0
        %957 = vmatpush2.msra.mxu0 0.0
        %958 = vmatprep.subr.mxu0 0.0
        %959 = vmatpush2.msra.mxu0 0.0
        %960 = vmatprep.subr.mxu0 0.0
        %961 = vmatpush2.msra.mxu0 0.0
        %962 = vmatprep.subr.mxu0 0.0
        %963 = vmatpush2.msra.mxu0 0.0
        %964 = vmatprep.subr.mxu0 0.0
        %965 = vmatpush2.msra.mxu0 0.0
        %966 = vmatprep.subr.mxu0 0.0
        %967 = vmatpush2.msra.mxu0 0.0
        %968 = vmatprep.subr.mxu0 0.0
        %969 = vmatpush2.msra.mxu0 0.0
        %970 = vmatprep.subr.mxu0 0.0
        %971 = vmatpush2.msra.mxu0 0.0
        %972 = vmatprep.subr.mxu0 0.0
        %973 = vmatpush2.msra.mxu0 0.0
        %974 = vmatprep.subr.mxu0 0.0
        %975 = vmatpush2.msra.mxu0 0.0
        %976 = vmatprep.mubr.f32.mxu0 0.0
        %977 = vmatmul.mubr.f32.gmra.mxu0 %v910
        %v978 = vpop.f32.mrf.mxu0
        %v979 = vadd.f32 0.0, %v978
        %v980 = vpop.f32.mrf.mxu0
        %981 = vdwg.mxu0
        %v982 = vadd.f32 %v900, %v979
        %v983 = vtanh.pop %v982
        %v984 = vld [vmem:[%s8] sm:$0xff]
        %v985 = vld [vmem:[%s8 + $0x8] sm:$0xff]
        %v986 = vld [vmem:[%s8 + $0x10] sm:$0xff]
        %v987 = vld [vmem:[%s8 + $0x18] sm:$0xff]
        %v988 = vld [vmem:[%s9] sm:$0xff]
        %v989 = vld [vmem:[%s9 + $0x8] sm:$0xff]
        %v990 = vld [vmem:[%s9 + $0x10] sm:$0xff]
        %v991 = vld [vmem:[%s9 + $0x18] sm:$0xff]
        %v993 = vsel %vm495, %v983, 0
        %995 = vmatprep.subr.mxu0 0.0
        %996 = vmatpush1.msra.mxu0 0.0
        %997 = vmatprep.subr.mxu0 0.0
        %998 = vmatpush1.msra.mxu0 0.0
        %999 = vmatprep.subr.mxu0 0.0
        %1000 = vmatpush1.msra.mxu0 0.0
        %1001 = vmatprep.subr.mxu0 0.0
        %1002 = vmatpush1.msra.mxu0 0.0
        %1003 = vmatprep.subr.mxu0 0.0
        %1004 = vmatpush1.msra.mxu0 0.0
        %1005 = vmatprep.subr.mxu0 0.0
        %1006 = vmatpush1.msra.mxu0 0.0
        %1007 = vmatprep.subr.mxu0 0.0
        %1008 = vmatpush1.msra.mxu0 0.0
        %1009 = vmatprep.subr.mxu0 0.0
        %1010 = vmatpush1.msra.mxu0 0.0
        %1011 = vmatprep.subr.mxu0 0.0
        %1012 = vmatpush1.msra.mxu0 0.0
        %1013 = vmatprep.subr.mxu0 0.0
        %1014 = vmatpush1.msra.mxu0 0.0
        %1015 = vmatprep.subr.mxu0 0.0
        %1016 = vmatpush1.msra.mxu0 0.0
        %1017 = vmatprep.subr.mxu0 0.0
        %1018 = vmatpush1.msra.mxu0 0.0
        %1019 = vmatprep.subr.mxu0 0.0
        %1020 = vmatpush1.msra.mxu0 %v991
        %1021 = vmatprep.subr.mxu0 0.0
        %1022 = vmatpush1.msra.mxu0 %v990
        %1023 = vmatprep.subr.mxu0 0.0
        %1024 = vmatpush1.msra.mxu0 %v989
        %1025 = vmatprep.subr.mxu0 0.0
        %1026 = vmatpush1.msra.mxu0 %v988
        %1027 = vmatprep.subr.mxu0 0.0
        %1028 = vmatpush2.msra.mxu0 0.0
        %1029 = vmatprep.subr.mxu0 0.0
        %1030 = vmatpush2.msra.mxu0 0.0
        %1031 = vmatprep.subr.mxu0 0.0
        %1032 = vmatpush2.msra.mxu0 0.0
        %1033 = vmatprep.subr.mxu0 0.0
        %1034 = vmatpush2.msra.mxu0 0.0
        %1035 = vmatprep.subr.mxu0 0.0
        %1036 = vmatpush2.msra.mxu0 0.0
        %1037 = vmatprep.subr.mxu0 0.0
        %1038 = vmatpush2.msra.mxu0 0.0
        %1039 = vmatprep.subr.mxu0 0.0
        %1040 = vmatpush2.msra.mxu0 0.0
        %1041 = vmatprep.subr.mxu0 0.0
        %1042 = vmatpush2.msra.mxu0 0.0
        %1043 = vmatprep.subr.mxu0 0.0
        %1044 = vmatpush2.msra.mxu0 0.0
        %1045 = vmatprep.subr.mxu0 0.0
        %1046 = vmatpush2.msra.mxu0 0.0
        %1047 = vmatprep.subr.mxu0 0.0
        %1048 = vmatpush2.msra.mxu0 0.0
        %1049 = vmatprep.subr.mxu0 0.0
        %1050 = vmatpush2.msra.mxu0 0.0
        %1051 = vmatprep.subr.mxu0 0.0
        %1052 = vmatpush2.msra.mxu0 0.0
        %1053 = vmatprep.subr.mxu0 0.0
        %1054 = vmatpush2.msra.mxu0 0.0
        %1055 = vmatprep.subr.mxu0 0.0
        %1056 = vmatpush2.msra.mxu0 0.0
        %1057 = vmatprep.subr.mxu0 0.0
        %1058 = vmatpush2.msra.mxu0 0.0
        %1059 = vmatprep.mubr.f32.mxu0 0.0
        %1060 = vmatmul.mubr.f32.gmra.mxu0 %v993
        %v1061 = vpop.f32.mrf.mxu0
        %v1062 = vadd.f32 0.0, %v1061
        %v1063 = vpop.f32.mrf.mxu0
        %1064 = vdwg.mxu0
        %v1066 = vsel %vm495, %v811, 0
        %1068 = vmatprep.subr.mxu0 0.0
        %1069 = vmatpush1.msra.mxu0 0.0
        %1070 = vmatprep.subr.mxu0 0.0
        %1071 = vmatpush1.msra.mxu0 0.0
        %1072 = vmatprep.subr.mxu0 0.0
        %1073 = vmatpush1.msra.mxu0 0.0
        %1074 = vmatprep.subr.mxu0 0.0
        %1075 = vmatpush1.msra.mxu0 0.0
        %1076 = vmatprep.subr.mxu0 0.0
        %1077 = vmatpush1.msra.mxu0 0.0
        %1078 = vmatprep.subr.mxu0 0.0
        %1079 = vmatpush1.msra.mxu0 0.0
        %1080 = vmatprep.subr.mxu0 0.0
        %1081 = vmatpush1.msra.mxu0 0.0
        %1082 = vmatprep.subr.mxu0 0.0
        %1083 = vmatpush1.msra.mxu0 0.0
        %1084 = vmatprep.subr.mxu0 0.0
        %1085 = vmatpush1.msra.mxu0 0.0
        %1086 = vmatprep.subr.mxu0 0.0
        %1087 = vmatpush1.msra.mxu0 0.0
        %1088 = vmatprep.subr.mxu0 0.0
        %1089 = vmatpush1.msra.mxu0 0.0
        %1090 = vmatprep.subr.mxu0 0.0
        %1091 = vmatpush1.msra.mxu0 0.0
        %1092 = vmatprep.subr.mxu0 0.0
        %1093 = vmatpush1.msra.mxu0 %v987
        %1094 = vmatprep.subr.mxu0 0.0
        %1095 = vmatpush1.msra.mxu0 %v986
        %1096 = vmatprep.subr.mxu0 0.0
        %1097 = vmatpush1.msra.mxu0 %v985
        %1098 = vmatprep.subr.mxu0 0.0
        %1099 = vmatpush1.msra.mxu0 %v984
        %1100 = vmatprep.subr.mxu0 0.0
        %1101 = vmatpush2.msra.mxu0 0.0
        %1102 = vmatprep.subr.mxu0 0.0
        %1103 = vmatpush2.msra.mxu0 0.0
        %1104 = vmatprep.subr.mxu0 0.0
        %1105 = vmatpush2.msra.mxu0 0.0
        %1106 = vmatprep.subr.mxu0 0.0
        %1107 = vmatpush2.msra.mxu0 0.0
        %1108 = vmatprep.subr.mxu0 0.0
        %1109 = vmatpush2.msra.mxu0 0.0
        %1110 = vmatprep.subr.mxu0 0.0
        %1111 = vmatpush2.msra.mxu0 0.0
        %1112 = vmatprep.subr.mxu0 0.0
        %1113 = vmatpush2.msra.mxu0 0.0
        %1114 = vmatprep.subr.mxu0 0.0
        %1115 = vmatpush2.msra.mxu0 0.0
        %1116 = vmatprep.subr.mxu0 0.0
        %1117 = vmatpush2.msra.mxu0 0.0
        %1118 = vmatprep.subr.mxu0 0.0
        %1119 = vmatpush2.msra.mxu0 0.0
        %1120 = vmatprep.subr.mxu0 0.0
        %1121 = vmatpush2.msra.mxu0 0.0
        %1122 = vmatprep.subr.mxu0 0.0
        %1123 = vmatpush2.msra.mxu0 0.0
        %1124 = vmatprep.subr.mxu0 0.0
        %1125 = vmatpush2.msra.mxu0 0.0
        %1126 = vmatprep.subr.mxu0 0.0
        %1127 = vmatpush2.msra.mxu0 0.0
        %1128 = vmatprep.subr.mxu0 0.0
        %1129 = vmatpush2.msra.mxu0 0.0
        %1130 = vmatprep.subr.mxu0 0.0
        %1131 = vmatpush2.msra.mxu0 0.0
        %1132 = vmatprep.mubr.f32.mxu0 0.0
        %1133 = vmatmul.mubr.f32.gmra.mxu0 %v1066
        %v1134 = vpop.f32.mrf.mxu0
        %v1135 = vadd.f32 %v1062, %v1134
        %v1136 = vpop.f32.mrf.mxu0
        %1137 = vdwg.mxu0
        %v1138 = vld [vmem:[%s10] sm:$0x1]
        %v1140 = vlaneseq
        %v1141 = vshrl.u32 %v1140, 7
        %v1142 = vsub.s32 0, %v1141
        %v1143 = vrot.slane %v1138, %v1142
        %v1145 = vadd.f32 %v1135, %v1143
        %1146 = vst.msk [vmem:[%s11] sm:$0xff] %vm393, %v1145
      $region72: #{icarnn_forward.1} parent=63 // pred_fallthru
        _
      // Predicated region
      $region73: #{icarnn_forward.1} parent=63 // pred_check
        %p1147 = pneg %p271
      $region74: #{icarnn_forward.1} parent=63 // pred_check_branch
        %1149 = sbr.rel (%p1147) target = $region76
      $region75: #{icarnn_forward.1} parent=63 // pred_region
        _
      $region76: #{icarnn_forward.1} parent=63 // pred_fallthru
        _
      // Predicated region
      $region77: #{icarnn_forward.1} parent=63 // pred_check
        %p1150 = pneg %p271
      $region78: #{icarnn_forward.1} parent=63 // pred_check_branch
        %1152 = sbr.rel (%p1150) target = $region80
      $region79: #{icarnn_forward.1} parent=63 // pred_region
        _
      $region80: #{icarnn_forward.1} parent=63 // pred_fallthru
        _
    $region64: #{icarnn_forward.1} parent=5 // pred_fallthru
      _
    %p1153 = scmp.le.s32.totalorder 2, %s17
    // Predicated region
    $region81: #{icarnn_forward.1} parent=5 // pred_check
      %p1154 = pneg %p1153
    $region82: #{icarnn_forward.1} parent=5 // pred_check_branch
      %1156 = sbr.rel (%p1154) target = $region84
    $region83: #{icarnn_forward.1} parent=5 // pred_region
      %s1157 = ssub.s32 %s17, 2
    $region84: #{icarnn_forward.1} parent=5 // pred_fallthru
      _
  $region6: #{icarnn_forward.1} parent=0 // loop_footer
    %s21 = sadd.s32 1, %s17
  $region7: #{icarnn_forward.1} parent=0 // loop_footer_branch
    %16 = sbr.rel target = $region3
  $region8: #{icarnn_forward.1} parent=0 // loop_exit
    _

</llo_original>
